<compile_context>
chip_gen: v5e
topology: v5e:2x2
jax: 0.10.0
libtpu: 0.0.40
codegen_flags: <defaults>
</compile_context>

<pallas_src>
import functools

import jax
import jax.numpy as jnp
from jax.experimental import pallas as pl
from jax.experimental.pallas import tpu as pltpu


def _deconv2x_relu_kernel(x_ref, w_ref, b_ref, o_ref, *, precision):
    # x_ref: (td*H*W, Cin)            rows = voxels of td consecutive (n, d) slices
    # w_ref: (4, Cin, 2*Cout)         resident; row k = 2*kd+kh, cols = (kw, co)
    # b_ref: (1, 2*Cout)              bias tiled over the two kw positions (f32)
    # o_ref: (td, 2, H, 2, W, 2*Cout) the full interleaved output block of this tile
    td, _, H, _, W, NOUT = o_ref.shape
    x = x_ref[...]
    b = b_ref[...]
    # Unrolled (kd, kh) loop: 4 MXU dots against the resident weight slab, each
    # written to a static slice of the single contiguous output block.  The block
    # is then written back to HBM as one contiguous DMA by the pipeline.
    for kd in range(2):
        for kh in range(2):
            k = 2 * kd + kh
            acc = jnp.dot(x, w_ref[k], preferred_element_type=jnp.float32,
                          precision=precision)
            acc = jnp.maximum(acc + b, 0.0)                 # bias + ReLU (f32)
            # (td*H*W, NOUT) -> (td, 1, H, 1, W, NOUT): free relabel when W % 8 == 0.
            o_ref[:, kd:kd + 1, :, kh:kh + 1, :, :] = (
                acc.reshape(td, 1, H, 1, W, NOUT).astype(o_ref.dtype))


def _vmem_capacity_bytes(default=64 * 1024 * 1024):
    """Physical VMEM per TensorCore (128 MiB v5e/v6e, 64 MiB v7x); conservative fallback."""
    try:
        cap = getattr(pltpu.get_tpu_info(), "vmem_capacity_bytes", None)
        if cap:
            return int(cap)
    except Exception:
        pass
    return default


def _pick_row_tile(nd, hw, bytes_per_slice, fixed_bytes, budget_bytes):
    """Largest divisor td of nd whose VMEM footprint (double-buffered in+out tiles,
    resident weights, f32 accumulator) fits the budget.

    Guarantees (when possible): td*hw % 8 == 0 (sublane-aligned input block),
    nd // td >= 2 (leading axis shards across v7x's two TCs), even step count."""
    divisors = [t for t in range(1, nd + 1) if nd % t == 0]
    fitting = [t for t in divisors
               if fixed_bytes + t * bytes_per_slice <= budget_bytes]
    if not fitting:
        fitting = [1]
    aligned = [t for t in fitting if (t * hw) % 8 == 0] or fitting
    multi = [t for t in aligned if nd // t >= 2] or aligned
    even = [t for t in multi if (nd // t) % 2 == 0] or multi
    return max(even)


def deconv2x2x2_relu_ndhwc(x, weight, bias, *, out_dtype=None, precision=None,
                           tile_vmem_budget_bytes=None, vmem_limit_bytes=None):
    """ConvTranspose3d(kernel=2, stride=2, padding=0) + ReLU, channels-last fast path.

    x:      (N, D, H, W, Cin)      float32 (or bfloat16 if the producer already
                                   emits bf16 -- do NOT cast just to feed this kernel,
                                   the standalone cast is an extra full HBM pass)
    weight: (Cin, Cout, 2, 2, 2)   PyTorch ConvTranspose3d layout
    bias:   (Cout,)
    out_dtype: defaults to x.dtype.  Pass jnp.bfloat16 whenever the consumer
               tolerates it: the output stream is the dominant HBM traffic
               (8*Cout bytes/voxel vs Cin read), so halving it is the single
               biggest wall-clock lever on this memory-bound op.
    precision: pass jax.lax.Precision.HIGHEST for exact fp32 parity with PyTorch
               (default MXU precision does a single bf16 pass for f32 inputs).
    returns (N, 2D, 2H, 2W, Cout)
    """
    N, D, H, W, Cin = x.shape
    Cout = weight.shape[1]
    NOUT = 2 * Cout                       # kernel-output last dim: (kw, co) folded
    out_dtype = jnp.dtype(out_dtype or x.dtype)

    # Generation-aware VMEM budgets (128 MiB v5e/v6e -> big tiles; 64 MiB v7x -> tight).
    vmem_cap = _vmem_capacity_bytes()
    if tile_vmem_budget_bytes is None:
        tile_vmem_budget_bytes = int(0.35 * vmem_cap)
    if vmem_limit_bytes is None:
        vmem_limit_bytes = int(0.75 * vmem_cap)

    # Weight slab: [2*kd+kh, ci, kw*Cout+co] = weight[ci, co, kd, kh, kw].
    # Parameter-sized, constant index_map -> DMA'd once, resident in VMEM.
    w_slab = jnp.transpose(weight, (2, 3, 0, 4, 1)).reshape(4, Cin, NOUT).astype(x.dtype)
    # Bias tiled over the two kw positions; added to the f32 accumulator.
    b_slab = jnp.tile(bias.astype(jnp.float32), 2).reshape(1, NOUT)

    # Input voxels as an (N*D*H*W, Cin) matrix -- a free, transpose-less reshape.
    x_rows = x.reshape(N * D * H * W, Cin)

    ND, HW = N * D, H * W
    in_itemsize = jnp.dtype(x.dtype).itemsize
    out_itemsize = out_dtype.itemsize
    # Per d-slice: double-buffered input tile + double-buffered (4x wider) output
    # block + f32 accumulator for one (kd, kh) sub-result.
    bytes_per_slice = (2 * HW * Cin * in_itemsize
                       + 2 * HW * 4 * NOUT * out_itemsize
                       + HW * NOUT * 4)
    # Fixed: double-buffered weight slab + bias + slack for internal scratch.
    fixed_bytes = 2 * (4 * Cin * NOUT * in_itemsize) + 2 * NOUT * 4 + (1 << 20)
    td = _pick_row_tile(ND, HW, bytes_per_slice, fixed_bytes, tile_vmem_budget_bytes)
    grid = (ND // td,)                    # single (parallel) axis of row tiles

    kernel = functools.partial(_deconv2x_relu_kernel, precision=precision)

    out = pl.pallas_call(
        kernel,
        out_shape=jax.ShapeDtypeStruct((ND, 2, H, 2, W, NOUT), out_dtype),
        grid_spec=pltpu.PrefetchScalarGridSpec(
            num_scalar_prefetch=0,
            grid=grid,
            in_specs=[
                # Row tile of input voxels.
                pl.BlockSpec((td * HW, Cin), lambda i: (i, 0)),
                # Whole weight slab / bias: constant index -> fetched once, resident.
                pl.BlockSpec((4, Cin, NOUT), lambda i: (0, 0, 0)),
                pl.BlockSpec((1, NOUT), lambda i: (0, 0)),
            ],
            # One fully contiguous interleaved output block per row tile:
            # (kd, kh) handled by static in-kernel slices, (kw, co) by lane order.
            out_specs=pl.BlockSpec((td, 2, H, 2, W, NOUT),
                                   lambda i: (i, 0, 0, 0, 0, 0)),
        ),
        compiler_params=pltpu.CompilerParams(
            # Single parallel axis; >= 2 (even) steps so it can shard across
            # v7x's two TensorCores.  (CORE_PARALLEL would make the split
            # explicit on v7x but is unnecessary for v5e/v6e single-TC chips.)
            dimension_semantics=("parallel",),
            vmem_limit_bytes=vmem_limit_bytes,
        ),
    )(x_rows, w_slab, b_slab)

    # Pure row-major regrouping: (N*D, 2, H, 2, W, 2*Cout) == (N, 2D, 2H, 2W, Cout).
    return out.reshape(N, 2 * D, 2 * H, 2 * W, Cout)


def upsampling_deconv_block(x, weight, bias, **kwargs):
    """PyTorch-layout wrapper: NCDHW in -> NCDHW out.

    PERFORMANCE HAZARD: the output-side transpose re-reads and re-writes the
    8x-larger output in HBM (roughly triples total traffic vs the kernel alone).
    Keep the surrounding model channels-last and call deconv2x2x2_relu_ndhwc
    directly whenever possible; this wrapper exists only for layout parity with
    the PyTorch module.
    """
    x_cl = jnp.transpose(x, (0, 2, 3, 4, 1))               # NCDHW -> NDHWC
    y_cl = deconv2x2x2_relu_ndhwc(x_cl, weight, bias, **kwargs)
    return jnp.transpose(y_cl, (0, 4, 1, 2, 3))            # NDHWC -> NCDHW


def _reference_ncdhw(x, weight, bias):
    # Pure-JAX reference for ConvTranspose3d(k=2, s=2, p=0) + ReLU in NCDHW.
    N, Cin, D, H, W = x.shape
    Cout = weight.shape[1]
    # out[n, co, d, kd, h, kh, w, kw]
    y = jnp.einsum("ncdhw,cokij->nodkhiwj", x, weight,
                   precision=jax.lax.Precision.HIGHEST)
    y = y + bias[None, :, None, None, None, None, None, None]
    y = jnp.maximum(y, 0.0)
    return y.reshape(N, Cout, 2 * D, 2 * H, 2 * W)


if __name__ == "__main__":
    key = jax.random.PRNGKey(0)
    k_x, k_w, k_b = jax.random.split(key, 3)

    # One real CVBM decoder stage (128 -> 64 channels) at small spatial size so the
    # output's last lane dim (2*Cout = 128) is lane-dense and W is 8-aligned.
    N, Cin, Cout, D, H, W = 2, 128, 64, 8, 8, 8
    x_ncdhw = jax.random.normal(k_x, (N, Cin, D, H, W), dtype=jnp.float32)
    weight = 0.1 * jax.random.normal(k_w, (Cin, Cout, 2, 2, 2), dtype=jnp.float32)
    bias = 0.05 * jax.random.normal(k_b, (Cout,), dtype=jnp.float32)

    ref = _reference_ncdhw(x_ncdhw, weight, bias)

    # PyTorch-layout path (NCDHW in / NCDHW out), matches the nn.Module exactly.
    out = jax.block_until_ready(upsampling_deconv_block(x_ncdhw, weight, bias))
    assert out.shape == (N, Cout, 2 * D, 2 * H, 2 * W)
    # Tolerance accounts for the MXU's default-precision (bf16-pass) f32 matmul;
    # pass precision=jax.lax.Precision.HIGHEST for exact fp32 parity.
    assert jnp.allclose(out, ref, atol=3e-2, rtol=3e-2)

    # Channels-last fast path (no layout passes around the kernel).
    x_cl = jnp.transpose(x_ncdhw, (0, 2, 3, 4, 1))
    out_cl = jax.block_until_ready(deconv2x2x2_relu_ndhwc(x_cl, weight, bias))
    assert out_cl.shape == (N, 2 * D, 2 * H, 2 * W, Cout)
    assert jnp.allclose(jnp.transpose(out_cl, (0, 4, 1, 2, 3)), ref, atol=3e-2, rtol=3e-2)

    # bf16 OUTPUT path (the dominant HBM stream): f32 input, f32 accumulation,
    # bf16 store.  No wrapper-side input cast -- that would be an extra HBM pass.
    out_bf16 = jax.block_until_ready(
        deconv2x2x2_relu_ndhwc(x_cl, weight, bias, out_dtype=jnp.bfloat16))
    assert out_bf16.dtype == jnp.bfloat16
    assert jnp.allclose(jnp.transpose(out_bf16.astype(jnp.float32), (0, 4, 1, 2, 3)),
                        ref, atol=6e-2, rtol=6e-2)

    print("KERNEL_OK")
</pallas_src>

<mosaic_0001>
module attributes {stable_mosaic.version = 11 : i64} {
  func.func @_deconv2x_relu_kernel(%arg0: i32, %arg1: memref<512x128xf32, #tpu.memory_space<vmem>>, %arg2: memref<4x128x128xf32, #tpu.memory_space<vmem>>, %arg3: memref<1x128xf32, #tpu.memory_space<vmem>>, %arg4: memref<8x2x8x2x8x128xf32, #tpu.memory_space<vmem>>) attributes {dimension_semantics = [#tpu.dimension_semantics<parallel>], iteration_bounds = array<i64: 2>, scalar_prefetch = 0 : i64, scratch_operands = 0 : i64, tpu.core_type = #tpu.core_type<tc>, window_params = [{transform_indices = @transform_0, window_bounds = array<i64: 512, 128>}, {pipeline_mode = #tpu.pipeline_mode<synchronous>, transform_indices = @transform_1, window_bounds = array<i64: 4, 128, 128>}, {pipeline_mode = #tpu.pipeline_mode<synchronous>, transform_indices = @transform_2, window_bounds = array<i64: 1, 128>}, {transform_indices = @transform_3, window_bounds = array<i64: 8, 2, 8, 2, 8, 128>}]} {
    %c0 = arith.constant 0 : index
    %c0_0 = arith.constant 0 : index
    %0 = vector.load %arg1[%c0, %c0_0] : memref<512x128xf32, #tpu.memory_space<vmem>>, vector<512x128xf32>
    %c0_1 = arith.constant 0 : index
    %c0_2 = arith.constant 0 : index
    %1 = vector.load %arg3[%c0_1, %c0_2] : memref<1x128xf32, #tpu.memory_space<vmem>>, vector<1x128xf32>
    %c0_3 = arith.constant 0 : index
    %c0_4 = arith.constant 0 : index
    %c0_5 = arith.constant 0 : index
    %2 = vector.load %arg2[%c0_3, %c0_4, %c0_5] : memref<4x128x128xf32, #tpu.memory_space<vmem>>, vector<1x128x128xf32>
    %3 = vector.shape_cast %2 : vector<1x128x128xf32> to vector<128x128xf32>
    %cst = arith.constant dense<0.000000e+00> : vector<512x128xf32>
    %4 = tpu.matmul %0, %3, %cst {dimension_numbers = #tpu.dot_dimension_numbers<[1], [0], [0], [1], [0, 0, 1, 1], [], []>} : vector<512x128xf32>, vector<128x128xf32>, vector<512x128xf32> -> vector<512x128xf32>
    %5 = vector.broadcast %1 : vector<1x128xf32> to vector<512x128xf32>
    %6 = arith.addf %4, %5 : vector<512x128xf32>
    %cst_6 = arith.constant 0.000000e+00 : f32
    %7 = vector.broadcast %cst_6 : f32 to vector<512x128xf32>
    %8 = arith.maximumf %6, %7 : vector<512x128xf32>
    %9 = vector.shape_cast %8 : vector<512x128xf32> to vector<8x1x8x1x8x128xf32>
    %c0_7 = arith.constant 0 : index
    %c0_8 = arith.constant 0 : index
    %c0_9 = arith.constant 0 : index
    %c0_10 = arith.constant 0 : index
    %c0_11 = arith.constant 0 : index
    %c0_12 = arith.constant 0 : index
    %10 = vector.load %arg4[%c0_7, %c0_8, %c0_9, %c0_10, %c0_11, %c0_12] : memref<8x2x8x2x8x128xf32, #tpu.memory_space<vmem>>, vector<8x1x8x1x8x128xf32>
    tpu.vector_store %arg4[%c0_7, %c0_8, %c0_9, %c0_10, %c0_11, %c0_12], %9 {strides = array<i32>} : memref<8x2x8x2x8x128xf32, #tpu.memory_space<vmem>>, vector<8x1x8x1x8x128xf32>,
    %c1 = arith.constant 1 : index
    %c0_13 = arith.constant 0 : index
    %c0_14 = arith.constant 0 : index
    %11 = vector.load %arg2[%c1, %c0_13, %c0_14] : memref<4x128x128xf32, #tpu.memory_space<vmem>>, vector<1x128x128xf32>
    %12 = vector.shape_cast %11 : vector<1x128x128xf32> to vector<128x128xf32>
    %cst_15 = arith.constant dense<0.000000e+00> : vector<512x128xf32>
    %13 = tpu.matmul %0, %12, %cst_15 {dimension_numbers = #tpu.dot_dimension_numbers<[1], [0], [0], [1], [0, 0, 1, 1], [], []>} : vector<512x128xf32>, vector<128x128xf32>, vector<512x128xf32> -> vector<512x128xf32>
    %14 = vector.broadcast %1 : vector<1x128xf32> to vector<512x128xf32>
    %15 = arith.addf %13, %14 : vector<512x128xf32>
    %cst_16 = arith.constant 0.000000e+00 : f32
    %16 = vector.broadcast %cst_16 : f32 to vector<512x128xf32>
    %17 = arith.maximumf %15, %16 : vector<512x128xf32>
    %18 = vector.shape_cast %17 : vector<512x128xf32> to vector<8x1x8x1x8x128xf32>
    %c0_17 = arith.constant 0 : index
    %c0_18 = arith.constant 0 : index
    %c0_19 = arith.constant 0 : index
    %c1_20 = arith.constant 1 : index
    %c0_21 = arith.constant 0 : index
    %c0_22 = arith.constant 0 : index
    %19 = vector.load %arg4[%c0_17, %c0_18, %c0_19, %c1_20, %c0_21, %c0_22] : memref<8x2x8x2x8x128xf32, #tpu.memory_space<vmem>>, vector<8x1x8x1x8x128xf32>
    tpu.vector_store %arg4[%c0_17, %c0_18, %c0_19, %c1_20, %c0_21, %c0_22], %18 {strides = array<i32>} : memref<8x2x8x2x8x128xf32, #tpu.memory_space<vmem>>, vector<8x1x8x1x8x128xf32>,
    %c2 = arith.constant 2 : index
    %c0_23 = arith.constant 0 : index
    %c0_24 = arith.constant 0 : index
    %20 = vector.load %arg2[%c2, %c0_23, %c0_24] : memref<4x128x128xf32, #tpu.memory_space<vmem>>, vector<1x128x128xf32>
    %21 = vector.shape_cast %20 : vector<1x128x128xf32> to vector<128x128xf32>
    %cst_25 = arith.constant dense<0.000000e+00> : vector<512x128xf32>
    %22 = tpu.matmul %0, %21, %cst_25 {dimension_numbers = #tpu.dot_dimension_numbers<[1], [0], [0], [1], [0, 0, 1, 1], [], []>} : vector<512x128xf32>, vector<128x128xf32>, vector<512x128xf32> -> vector<512x128xf32>
    %23 = vector.broadcast %1 : vector<1x128xf32> to vector<512x128xf32>
    %24 = arith.addf %22, %23 : vector<512x128xf32>
    %cst_26 = arith.constant 0.000000e+00 : f32
    %25 = vector.broadcast %cst_26 : f32 to vector<512x128xf32>
    %26 = arith.maximumf %24, %25 : vector<512x128xf32>
    %27 = vector.shape_cast %26 : vector<512x128xf32> to vector<8x1x8x1x8x128xf32>
    %c0_27 = arith.constant 0 : index
    %c1_28 = arith.constant 1 : index
    %c0_29 = arith.constant 0 : index
    %c0_30 = arith.constant 0 : index
    %c0_31 = arith.constant 0 : index
    %c0_32 = arith.constant 0 : index
    %28 = vector.load %arg4[%c0_27, %c1_28, %c0_29, %c0_30, %c0_31, %c0_32] : memref<8x2x8x2x8x128xf32, #tpu.memory_space<vmem>>, vector<8x1x8x1x8x128xf32>
    tpu.vector_store %arg4[%c0_27, %c1_28, %c0_29, %c0_30, %c0_31, %c0_32], %27 {strides = array<i32>} : memref<8x2x8x2x8x128xf32, #tpu.memory_space<vmem>>, vector<8x1x8x1x8x128xf32>,
    %c3 = arith.constant 3 : index
    %c0_33 = arith.constant 0 : index
    %c0_34 = arith.constant 0 : index
    %29 = vector.load %arg2[%c3, %c0_33, %c0_34] : memref<4x128x128xf32, #tpu.memory_space<vmem>>, vector<1x128x128xf32>
    %30 = vector.shape_cast %29 : vector<1x128x128xf32> to vector<128x128xf32>
    %cst_35 = arith.constant dense<0.000000e+00> : vector<512x128xf32>
    %31 = tpu.matmul %0, %30, %cst_35 {dimension_numbers = #tpu.dot_dimension_numbers<[1], [0], [0], [1], [0, 0, 1, 1], [], []>} : vector<512x128xf32>, vector<128x128xf32>, vector<512x128xf32> -> vector<512x128xf32>
    %32 = vector.broadcast %1 : vector<1x128xf32> to vector<512x128xf32>
    %33 = arith.addf %31, %32 : vector<512x128xf32>
    %cst_36 = arith.constant 0.000000e+00 : f32
    %34 = vector.broadcast %cst_36 : f32 to vector<512x128xf32>
    %35 = arith.maximumf %33, %34 : vector<512x128xf32>
    %36 = vector.shape_cast %35 : vector<512x128xf32> to vector<8x1x8x1x8x128xf32>
    %c0_37 = arith.constant 0 : index
    %c1_38 = arith.constant 1 : index
    %c0_39 = arith.constant 0 : index
    %c1_40 = arith.constant 1 : index
    %c0_41 = arith.constant 0 : index
    %c0_42 = arith.constant 0 : index
    %37 = vector.load %arg4[%c0_37, %c1_38, %c0_39, %c1_40, %c0_41, %c0_42] : memref<8x2x8x2x8x128xf32, #tpu.memory_space<vmem>>, vector<8x1x8x1x8x128xf32>
    tpu.vector_store %arg4[%c0_37, %c1_38, %c0_39, %c1_40, %c0_41, %c0_42], %36 {strides = array<i32>} : memref<8x2x8x2x8x128xf32, #tpu.memory_space<vmem>>, vector<8x1x8x1x8x128xf32>,
    return
  }
  func.func @transform_0(%arg0: i32) -> (i32, i32) {
    %c0_i32 = arith.constant 0 : i32
    %c0_i32_0 = arith.constant 0 : i32
    return %arg0, %c0_i32 : i32, i32
  }
  func.func @transform_1(%arg0: i32) -> (i32, i32, i32) {
    %c0_i32 = arith.constant 0 : i32
    %c0_i32_0 = arith.constant 0 : i32
    %c0_i32_1 = arith.constant 0 : i32
    %c0_i32_2 = arith.constant 0 : i32
    return %c0_i32, %c0_i32_0, %c0_i32_1 : i32, i32, i32
  }
  func.func @transform_2(%arg0: i32) -> (i32, i32) {
    %c0_i32 = arith.constant 0 : i32
    %c0_i32_0 = arith.constant 0 : i32
    %c0_i32_1 = arith.constant 0 : i32
    return %c0_i32, %c0_i32_0 : i32, i32
  }
  func.func @transform_3(%arg0: i32) -> (i32, i32, i32, i32, i32, i32) {
    %c0_i32 = arith.constant 0 : i32
    %c0_i32_0 = arith.constant 0 : i32
    %c0_i32_1 = arith.constant 0 : i32
    %c0_i32_2 = arith.constant 0 : i32
    %c0_i32_3 = arith.constant 0 : i32
    %c0_i32_4 = arith.constant 0 : i32
    return %arg0, %c0_i32, %c0_i32_0, %c0_i32_1, %c0_i32_2, %c0_i32_3 : i32, i32, i32, i32, i32, i32
  }
}

</mosaic_0001>

<llo_original>
// kernel: tpu_custom_call.1
$region0: #{tpu_custom_call.1}
  #allocation0 [shape = 'u32[]', space=smem, size = 0x4, offset = 0x4, fixed_abs, tag = 'smem constant byte address 0x4 - core index']
  #allocation1 [shape = 'u32[72,128]{1,0:T(1,128)}', space=vmem, size = 0x9000, scoped, tag = 'internal scratch']
  %s0 = inlined_call_operand.hbm [shape: f32[1024,128], index: 0, kind: input, shape index: {}]
  %s1 = inlined_call_operand.hbm [shape: f32[4,128,128], index: 1, kind: input, shape index: {}]
  %s2 = inlined_call_operand.hbm [shape: f32[1,128], index: 2, kind: input, shape index: {}]
  %s3 = inlined_call_operand.hbm [shape: f32[16,2,8,2,8,128], index: 3, kind: output, shape index: {}]
  %s4 = sld [smem:[#allocation0]]
  $region57: #{tpu_custom_call.1} parent=0
    _
  %s6 = ssub.s32 1, %s4
  %s7 = scalar_select 0, %s6, %s4
  $region1: #{tpu_custom_call.1} parent=0
    #allocation2 [shape = 'u8[524288]{0}', space=vmem, size = 0x80000, scoped, tag = 'input window, operand 0']
    #allocation3 [shape = 's32[2]{0}', space=sflag, size = 0x8, scoped, tag = 'scoped memory for tpu_custom_call.1']
    #allocation4 [shape = 's32[2]{0}', space=sflag, size = 0x8, scoped, tag = 'scoped memory for tpu_custom_call.1']
    #allocation5 [shape = 'u8[262144]{0}', space=vmem, size = 0x40000, scoped, tag = 'input window, operand 1, single buffered']
    #allocation6 [shape = 's32[1]{0}', space=sflag, size = 0x4, scoped, tag = 'scoped memory for tpu_custom_call.1']
    #allocation7 [shape = 'u8[512]{0}', space=vmem, size = 0x400, scoped, tag = 'input window, operand 2, single buffered']
    #allocation8 [shape = 'u8[2097152]{0}', space=vmem, size = 0x200000, scoped, tag = 'output window, operand 0']
    %8 = vsyncpa [#allocation3], 0
    %s9 = scalar_lea.sflag [#allocation3], 1
    %10 = vsyncpa %s9, 0
    %11 = vsyncpa [#allocation6], 0
    %12 = vsyncpa [#allocation4], 0
    %s13 = scalar_lea.sflag [#allocation4], 1
    %14 = vsyncpa %s13, 0
    loop: start=0, step=1, limit=4
    $region2: #{tpu_custom_call.1} parent=1 // loop_pre_header
      _
    $region3: #{tpu_custom_call.1} parent=1 // loop_header
      %s16 = sphi 0, %s20
      %p17 = scmp.ge.s32.totalorder %s16, 4
      %s26 = sphi 0, %s28
      %s29 = sphi 0, %s26
      %s30 = sphi 0, %s29
      %s46 = sphi 0, %s30
      %s50 = sphi 0, %s50
      %s52 = sphi 0, %s50
      %s53 = sphi 0, %s52
      %s67 = sphi 0, %s53
      %s71 = sphi 0, %s71
      %s73 = sphi 0, %s71
      %s74 = sphi 0, %s73
      %s88 = sphi 0, %s74
      %s94 = sphi 0, %s96
      %s97 = sphi 0, %s94
      %s98 = sphi 0, %s97
      %s114 = sphi 0, %s98
    $region4: #{tpu_custom_call.1} parent=1 // loop_header_branch
      %19 = sbr.rel (%p17) target = $region8
    $region5: #{tpu_custom_call.1} parent=1 // loop_body
      %s21 = ssub.s32 %s16, 1
      %s22 = ssub.s32 %s16, 2
      %s23 = sadd.s32 %s16, 1
      %s24 = ssub.s32 %s16, %s23
      %p25 = scmp.eq.s32.totalorder %s24, 0
      %s27 = sadd.s32 %s26, 1
      %s28 = scalar_select %p25, %s26, %s27
      %p31 = pneg %p25
      %p32 = scmp.eq.s32.totalorder %s16, 1
      %p33 = por %p31, %p32
      %p34 = scmp.ne.s32.totalorder %s26, %s29
      %p35 = scmp.eq.s32.totalorder %s16, 0
      %p36 = por %p34, %p35
      %p37 = scmp.ne.s32.totalorder %s26, %s29
      %p38 = scmp.eq.s32.totalorder %s21, 1
      %p39 = por %p37, %p38
      %p40 = scmp.ne.s32.totalorder %s29, %s30
      %p41 = scmp.eq.s32.totalorder %s21, 0
      %p42 = por %p40, %p41
      %p43 = scmp.ne.s32.totalorder %s29, %s30
      %p44 = scmp.eq.s32.totalorder %s22, 1
      %p45 = por %p43, %p44
      %p47 = scmp.ne.s32.totalorder %s30, %s46
      %p48 = scmp.eq.s32.totalorder %s22, 0
      %p49 = por %p47, %p48
      %s51 = sadd.s32 %s50, 1
      %p54 = scmp.eq.s32.totalorder %s16, 1
      %p55 = scmp.ne.s32.totalorder %s50, %s52
      %p56 = scmp.eq.s32.totalorder %s16, 0
      %p57 = por %p55, %p56
      %p58 = scmp.ne.s32.totalorder %s50, %s52
      %p59 = scmp.eq.s32.totalorder %s21, 1
      %p60 = por %p58, %p59
      %p61 = scmp.ne.s32.totalorder %s52, %s53
      %p62 = scmp.eq.s32.totalorder %s21, 0
      %p63 = por %p61, %p62
      %p64 = scmp.ne.s32.totalorder %s52, %s53
      %p65 = scmp.eq.s32.totalorder %s22, 1
      %p66 = por %p64, %p65
      %p68 = scmp.ne.s32.totalorder %s53, %s67
      %p69 = scmp.eq.s32.totalorder %s22, 0
      %p70 = por %p68, %p69
      %s72 = sadd.s32 %s71, 1
      %p75 = scmp.eq.s32.totalorder %s16, 1
      %p76 = scmp.ne.s32.totalorder %s71, %s73
      %p77 = scmp.eq.s32.totalorder %s16, 0
      %p78 = por %p76, %p77
      %p79 = scmp.ne.s32.totalorder %s71, %s73
      %p80 = scmp.eq.s32.totalorder %s21, 1
      %p81 = por %p79, %p80
      %p82 = scmp.ne.s32.totalorder %s73, %s74
      %p83 = scmp.eq.s32.totalorder %s21, 0
      %p84 = por %p82, %p83
      %p85 = scmp.ne.s32.totalorder %s73, %s74
      %p86 = scmp.eq.s32.totalorder %s22, 1
      %p87 = por %p85, %p86
      %p89 = scmp.ne.s32.totalorder %s74, %s88
      %p90 = scmp.eq.s32.totalorder %s22, 0
      %p91 = por %p89, %p90
      %s92 = ssub.s32 %s16, %s23
      %p93 = scmp.eq.s32.totalorder %s92, 0
      %s95 = sadd.s32 %s94, 1
      %s96 = scalar_select %p93, %s94, %s95
      %p99 = pneg %p93
      %p100 = scmp.eq.s32.totalorder %s16, 1
      %p101 = por %p99, %p100
      %p102 = scmp.ne.s32.totalorder %s94, %s97
      %p103 = scmp.eq.s32.totalorder %s16, 0
      %p104 = por %p102, %p103
      %p105 = scmp.ne.s32.totalorder %s94, %s97
      %p106 = scmp.eq.s32.totalorder %s21, 1
      %p107 = por %p105, %p106
      %p108 = scmp.ne.s32.totalorder %s97, %s98
      %p109 = scmp.eq.s32.totalorder %s21, 0
      %p110 = por %p108, %p109
      %p111 = scmp.ne.s32.totalorder %s97, %s98
      %p112 = scmp.eq.s32.totalorder %s22, 1
      %p113 = por %p111, %p112
      %p115 = scmp.ne.s32.totalorder %s98, %s114
      %p116 = scmp.eq.s32.totalorder %s22, 0
      %p117 = por %p115, %p116
      %p118 = scmp.le.s32.totalorder 1, %s16
      %p119 = scmp.lt.s32.totalorder %s16, 3
      %p120 = pnand %p118, %p119
      %p121 = pneg %p120
      // Predicated region
      $region9: #{tpu_custom_call.1} parent=5 // pred_check
        _
      $region10: #{tpu_custom_call.1} parent=5 // pred_check_branch
        %123 = sbr.rel (%p120) target = $region12
      $region11: #{tpu_custom_call.1} parent=5 // pred_region
        %s124 = ssub.s32 %s16, 1
        // Predicated region
        $region13: #{tpu_custom_call.1} parent=11 // pred_check
          %p125 = pneg %p63
        $region14: #{tpu_custom_call.1} parent=11 // pred_check_branch
          %127 = sbr.rel (%p125) target = $region16
        $region15: #{tpu_custom_call.1} parent=11 // pred_region
          %129 = vsyncadd [#allocation6], 0
          %s130 = sshll.u32 %s1, 4
          %s131 = int_to_ptr.hbm [resolvable:$true] %s130
          %s132 = sshll.u32 [#allocation5], 4
          %s133 = int_to_ptr.vmem [resolvable:$true] %s132
          %138 = dma.hbm_to_vmem [thread:$0]  %s131, 8192, %s133, [#allocation6], 128, 128, 8
        $region16: #{tpu_custom_call.1} parent=11 // pred_fallthru
          _
        // Predicated region
        $region17: #{tpu_custom_call.1} parent=11 // pred_check
          %p139 = pneg %p84
        $region18: #{tpu_custom_call.1} parent=11 // pred_check_branch
          %141 = sbr.rel (%p139) target = $region20
        $region19: #{tpu_custom_call.1} parent=11 // pred_region
          %143 = vsyncadd [#allocation6], 0
          %s145 = sshll.u32 %s2, 4
          %s146 = int_to_ptr.hbm [resolvable:$true] %s145
          %s147 = sshll.u32 [#allocation7], 4
          %s148 = int_to_ptr.vmem [resolvable:$true] %s147
          %150 = dma.hbm_to_vmem [thread:$0]  %s146, 16, %s148, [#allocation6]
        $region20: #{tpu_custom_call.1} parent=11 // pred_fallthru
          _
      $region12: #{tpu_custom_call.1} parent=5 // pred_fallthru
        _
      %p151 = scmp.lt.s32.totalorder %s16, 2
      // Predicated region
      $region21: #{tpu_custom_call.1} parent=5 // pred_check
        %p152 = pneg %p151
      $region22: #{tpu_custom_call.1} parent=5 // pred_check_branch
        %154 = sbr.rel (%p152) target = $region24
      $region23: #{tpu_custom_call.1} parent=5 // pred_region
        // Predicated region
        $region25: #{tpu_custom_call.1} parent=23 // pred_check
          %p155 = pneg %p36
        $region26: #{tpu_custom_call.1} parent=23 // pred_check_branch
          %157 = sbr.rel (%p155) target = $region28
        $region27: #{tpu_custom_call.1} parent=23 // pred_region
          %s158 = sand.u32 %s26, 1
          %s159 = scalar_lea.sflag [#allocation3], %s158
          %s160 = sand.u32 %s26, 1
          %s161 = smul.addr %s160, 512
          %s162 = scalar_lea.vmem [#allocation2], %s161
          %s163 = smul.u32 64, %s16
          %165 = vsyncadd %s159, 0
          %s166 = smul.addr %s163, 8
          %s167 = scalar_lea.hbm %s0, %s166
          %s168 = sshll.u32 %s167, 4
          %s169 = int_to_ptr.hbm [resolvable:$true] %s168
          %s170 = sshll.u32 %s162, 4
          %s171 = int_to_ptr.vmem [resolvable:$true] %s170
          %176 = dma.hbm_to_vmem [thread:$0]  %s169, 8192, %s171, %s159, 128, 128, 8
        $region28: #{tpu_custom_call.1} parent=23 // pred_fallthru
          _
      $region24: #{tpu_custom_call.1} parent=5 // pred_fallthru
        _
      %p177 = scmp.le.s32.totalorder 1, %s16
      %p178 = scmp.lt.s32.totalorder %s16, 3
      %p179 = pnand %p177, %p178
      %p180 = pneg %p179
      // Predicated region
      $region29: #{tpu_custom_call.1} parent=5 // pred_check
        _
      $region30: #{tpu_custom_call.1} parent=5 // pred_check_branch
        %182 = sbr.rel (%p179) target = $region32
      $region31: #{tpu_custom_call.1} parent=5 // pred_region
        %s183 = ssub.s32 %s16, 1
        %s184 = sand.u32 %s29, 1
        %s185 = scalar_lea.sflag [#allocation3], %s184
        %s186 = sand.u32 %s29, 1
        %s187 = smul.addr %s186, 512
        %s188 = scalar_lea.vmem [#allocation2], %s187
        // Predicated region
        $region33: #{tpu_custom_call.1} parent=31 // pred_check
          %p189 = pneg %p42
        $region34: #{tpu_custom_call.1} parent=31 // pred_check_branch
          %191 = sbr.rel (%p189) target = $region36
        $region35: #{tpu_custom_call.1} parent=31 // pred_region
          %193 = dma.done %s185, 8192
        $region36: #{tpu_custom_call.1} parent=31 // pred_fallthru
          _
        // Predicated region
        $region37: #{tpu_custom_call.1} parent=31 // pred_check
          %p194 = pneg %p63
        $region38: #{tpu_custom_call.1} parent=31 // pred_check_branch
          %196 = sbr.rel (%p194) target = $region40
        $region39: #{tpu_custom_call.1} parent=31 // pred_region
          %198 = dma.done [#allocation6], 8192
        $region40: #{tpu_custom_call.1} parent=31 // pred_fallthru
          _
        // Predicated region
        $region41: #{tpu_custom_call.1} parent=31 // pred_check
          %p199 = pneg %p84
        $region42: #{tpu_custom_call.1} parent=31 // pred_check_branch
          %201 = sbr.rel (%p199) target = $region44
        $region43: #{tpu_custom_call.1} parent=31 // pred_region
          %203 = dma.done [#allocation6], 16
        $region44: #{tpu_custom_call.1} parent=31 // pred_fallthru
          _
        %s204 = sand.u32 %s29, 1
        %s205 = scalar_lea.sflag [#allocation3], %s204
        %s206 = sand.u32 %s29, 1
        %s207 = smul.addr %s206, 512
        %s208 = scalar_lea.vmem [#allocation2], %s207
        %p209 = pneg %p42
        %p210 = pneg %p39
        %p211 = pneg %p63
        %p212 = pneg %p60
        %p213 = pneg %p84
        %p214 = pneg %p81
        %p215 = pneg %p110
        %p216 = pneg %p107
        %s217 = sand.u32 %s97, 1
        %s218 = scalar_lea.sflag [#allocation4], %s217
        %s219 = sand.u32 %s97, 1
        %s220 = smul.addr %s219, 2048
        %s221 = scalar_lea.vmem [#allocation8], %s220
        %s222 = smul.u32 64, %s21
        %s223 = smul.u32 8, %s21
        %v224 = vld [vmem:[%s188] sm:$0xff]
        %v225 = vld [vmem:[%s188 + $0x8] sm:$0xff]
        %v226 = vld [vmem:[%s188 + $0x10] sm:$0xff]
        %v227 = vld [vmem:[%s188 + $0x18] sm:$0xff]
        %v228 = vld [vmem:[%s188 + $0x20] sm:$0xff]
        %v229 = vld [vmem:[%s188 + $0x28] sm:$0xff]
        %v230 = vld [vmem:[%s188 + $0x30] sm:$0xff]
        %v231 = vld [vmem:[%s188 + $0x38] sm:$0xff]
        %v232 = vld [vmem:[%s188 + $0x40] sm:$0xff]
        %v233 = vld [vmem:[%s188 + $0x48] sm:$0xff]
        %v234 = vld [vmem:[%s188 + $0x50] sm:$0xff]
        %v235 = vld [vmem:[%s188 + $0x58] sm:$0xff]
        %v236 = vld [vmem:[%s188 + $0x60] sm:$0xff]
        %v237 = vld [vmem:[%s188 + $0x68] sm:$0xff]
        %v238 = vld [vmem:[%s188 + $0x70] sm:$0xff]
        %v239 = vld [vmem:[%s188 + $0x78] sm:$0xff]
        %v240 = vld [vmem:[%s188 + $0x80] sm:$0xff]
        %v241 = vld [vmem:[%s188 + $0x88] sm:$0xff]
        %v242 = vld [vmem:[%s188 + $0x90] sm:$0xff]
        %v243 = vld [vmem:[%s188 + $0x98] sm:$0xff]
        %v244 = vld [vmem:[%s188 + $0xa0] sm:$0xff]
        %v245 = vld [vmem:[%s188 + $0xa8] sm:$0xff]
        %v246 = vld [vmem:[%s188 + $0xb0] sm:$0xff]
        %v247 = vld [vmem:[%s188 + $0xb8] sm:$0xff]
        %v248 = vld [vmem:[%s188 + $0xc0] sm:$0xff]
        %v249 = vld [vmem:[%s188 + $0xc8] sm:$0xff]
        %v250 = vld [vmem:[%s188 + $0xd0] sm:$0xff]
        %v251 = vld [vmem:[%s188 + $0xd8] sm:$0xff]
        %v252 = vld [vmem:[%s188 + $0xe0] sm:$0xff]
        %v253 = vld [vmem:[%s188 + $0xe8] sm:$0xff]
        %v254 = vld [vmem:[%s188 + $0xf0] sm:$0xff]
        %v255 = vld [vmem:[%s188 + $0xf8] sm:$0xff]
        %v256 = vld [vmem:[%s188 + $0x100] sm:$0xff]
        %v257 = vld [vmem:[%s188 + $0x108] sm:$0xff]
        %v258 = vld [vmem:[%s188 + $0x110] sm:$0xff]
        %v259 = vld [vmem:[%s188 + $0x118] sm:$0xff]
        %v260 = vld [vmem:[%s188 + $0x120] sm:$0xff]
        %v261 = vld [vmem:[%s188 + $0x128] sm:$0xff]
        %v262 = vld [vmem:[%s188 + $0x130] sm:$0xff]
        %v263 = vld [vmem:[%s188 + $0x138] sm:$0xff]
        %v264 = vld [vmem:[%s188 + $0x140] sm:$0xff]
        %v265 = vld [vmem:[%s188 + $0x148] sm:$0xff]
        %v266 = vld [vmem:[%s188 + $0x150] sm:$0xff]
        %v267 = vld [vmem:[%s188 + $0x158] sm:$0xff]
        %v268 = vld [vmem:[%s188 + $0x160] sm:$0xff]
        %v269 = vld [vmem:[%s188 + $0x168] sm:$0xff]
        %v270 = vld [vmem:[%s188 + $0x170] sm:$0xff]
        %v271 = vld [vmem:[%s188 + $0x178] sm:$0xff]
        %v272 = vld [vmem:[%s188 + $0x180] sm:$0xff]
        %v273 = vld [vmem:[%s188 + $0x188] sm:$0xff]
        %v274 = vld [vmem:[%s188 + $0x190] sm:$0xff]
        %v275 = vld [vmem:[%s188 + $0x198] sm:$0xff]
        %v276 = vld [vmem:[%s188 + $0x1a0] sm:$0xff]
        %v277 = vld [vmem:[%s188 + $0x1a8] sm:$0xff]
        %v278 = vld [vmem:[%s188 + $0x1b0] sm:$0xff]
        %v279 = vld [vmem:[%s188 + $0x1b8] sm:$0xff]
        %v280 = vld [vmem:[%s188 + $0x1c0] sm:$0xff]
        %v281 = vld [vmem:[%s188 + $0x1c8] sm:$0xff]
        %v282 = vld [vmem:[%s188 + $0x1d0] sm:$0xff]
        %v283 = vld [vmem:[%s188 + $0x1d8] sm:$0xff]
        %v284 = vld [vmem:[%s188 + $0x1e0] sm:$0xff]
        %v285 = vld [vmem:[%s188 + $0x1e8] sm:$0xff]
        %v286 = vld [vmem:[%s188 + $0x1f0] sm:$0xff]
        %v287 = vld [vmem:[%s188 + $0x1f8] sm:$0xff]
        %v288 = vld [vmem:[#allocation7] sm:$0x1]
        %v289 = vld [vmem:[#allocation5] sm:$0xff]
        %v290 = vld [vmem:[#allocation5 + $0x8] sm:$0xff]
        %v291 = vld [vmem:[#allocation5 + $0x10] sm:$0xff]
        %v292 = vld [vmem:[#allocation5 + $0x18] sm:$0xff]
        %v293 = vld [vmem:[#allocation5 + $0x20] sm:$0xff]
        %v294 = vld [vmem:[#allocation5 + $0x28] sm:$0xff]
        %v295 = vld [vmem:[#allocation5 + $0x30] sm:$0xff]
        %v296 = vld [vmem:[#allocation5 + $0x38] sm:$0xff]
        %v297 = vld [vmem:[#allocation5 + $0x40] sm:$0xff]
        %v298 = vld [vmem:[#allocation5 + $0x48] sm:$0xff]
        %v299 = vld [vmem:[#allocation5 + $0x50] sm:$0xff]
        %v300 = vld [vmem:[#allocation5 + $0x58] sm:$0xff]
        %v301 = vld [vmem:[#allocation5 + $0x60] sm:$0xff]
        %v302 = vld [vmem:[#allocation5 + $0x68] sm:$0xff]
        %v303 = vld [vmem:[#allocation5 + $0x70] sm:$0xff]
        %v304 = vld [vmem:[#allocation5 + $0x78] sm:$0xff]
        %v306 = vperm.slane %v288, 0
        %308 = vmatpush.msra.mxu0 %v304
        %309 = vmatpush.msra.mxu0 %v303
        %310 = vmatpush.msra.mxu0 %v302
        %311 = vmatpush.msra.mxu0 %v301
        %312 = vmatpush.msra.mxu0 %v300
        %313 = vmatpush.msra.mxu0 %v299
        %314 = vmatpush.msra.mxu0 %v298
        %315 = vmatpush.msra.mxu0 %v297
        %316 = vmatpush.msra.mxu0 %v296
        %317 = vmatpush.msra.mxu0 %v295
        %318 = vmatpush.msra.mxu0 %v294
        %319 = vmatpush.msra.mxu0 %v293
        %320 = vmatpush.msra.mxu0 %v292
        %321 = vmatpush.msra.mxu0 %v291
        %322 = vmatpush.msra.mxu0 %v290
        %323 = vmatpush.msra.mxu0 %v289
        %324 = vmatmul.f32.gmra.mxu0 %v224
        %v325 = vpop.f32.mrf.mxu0
        %v326 = vadd.f32 %v306, %v325
        %327 = vmatmul.f32.gmra.mxu0 %v225
        %v328 = vpop.f32.mrf.mxu0
        %v329 = vadd.f32 %v306, %v328
        %330 = vmatmul.f32.gmra.mxu0 %v226
        %v331 = vpop.f32.mrf.mxu0
        %v332 = vadd.f32 %v306, %v331
        %333 = vmatmul.f32.gmra.mxu0 %v227
        %v334 = vpop.f32.mrf.mxu0
        %v335 = vadd.f32 %v306, %v334
        %336 = vmatmul.f32.gmra.mxu0 %v228
        %v337 = vpop.f32.mrf.mxu0
        %v338 = vadd.f32 %v306, %v337
        %339 = vmatmul.f32.gmra.mxu0 %v229
        %v340 = vpop.f32.mrf.mxu0
        %v341 = vadd.f32 %v306, %v340
        %342 = vmatmul.f32.gmra.mxu0 %v230
        %v343 = vpop.f32.mrf.mxu0
        %v344 = vadd.f32 %v306, %v343
        %345 = vmatmul.f32.gmra.mxu0 %v231
        %v346 = vpop.f32.mrf.mxu0
        %v347 = vadd.f32 %v306, %v346
        %348 = vmatmul.f32.gmra.mxu0 %v232
        %v349 = vpop.f32.mrf.mxu0
        %v350 = vadd.f32 %v306, %v349
        %351 = vmatmul.f32.gmra.mxu0 %v233
        %v352 = vpop.f32.mrf.mxu0
        %v353 = vadd.f32 %v306, %v352
        %354 = vmatmul.f32.gmra.mxu0 %v234
        %v355 = vpop.f32.mrf.mxu0
        %v356 = vadd.f32 %v306, %v355
        %357 = vmatmul.f32.gmra.mxu0 %v235
        %v358 = vpop.f32.mrf.mxu0
        %v359 = vadd.f32 %v306, %v358
        %360 = vmatmul.f32.gmra.mxu0 %v236
        %v361 = vpop.f32.mrf.mxu0
        %v362 = vadd.f32 %v306, %v361
        %363 = vmatmul.f32.gmra.mxu0 %v237
        %v364 = vpop.f32.mrf.mxu0
        %v365 = vadd.f32 %v306, %v364
        %366 = vmatmul.f32.gmra.mxu0 %v238
        %v367 = vpop.f32.mrf.mxu0
        %v368 = vadd.f32 %v306, %v367
        %369 = vmatmul.f32.gmra.mxu0 %v239
        %v370 = vpop.f32.mrf.mxu0
        %v371 = vadd.f32 %v306, %v370
        %372 = vmatmul.f32.gmra.mxu0 %v240
        %v373 = vpop.f32.mrf.mxu0
        %v374 = vadd.f32 %v306, %v373
        %375 = vmatmul.f32.gmra.mxu0 %v241
        %v376 = vpop.f32.mrf.mxu0
        %v377 = vadd.f32 %v306, %v376
        %378 = vmatmul.f32.gmra.mxu0 %v242
        %v379 = vpop.f32.mrf.mxu0
        %v380 = vadd.f32 %v306, %v379
        %381 = vmatmul.f32.gmra.mxu0 %v243
        %v382 = vpop.f32.mrf.mxu0
        %v383 = vadd.f32 %v306, %v382
        %384 = vmatmul.f32.gmra.mxu0 %v244
        %v385 = vpop.f32.mrf.mxu0
        %v386 = vadd.f32 %v306, %v385
        %387 = vmatmul.f32.gmra.mxu0 %v245
        %v388 = vpop.f32.mrf.mxu0
        %v389 = vadd.f32 %v306, %v388
        %390 = vmatmul.f32.gmra.mxu0 %v246
        %v391 = vpop.f32.mrf.mxu0
        %v392 = vadd.f32 %v306, %v391
        %393 = vmatmul.f32.gmra.mxu0 %v247
        %v394 = vpop.f32.mrf.mxu0
        %v395 = vadd.f32 %v306, %v394
        %396 = vmatmul.f32.gmra.mxu0 %v248
        %v397 = vpop.f32.mrf.mxu0
        %v398 = vadd.f32 %v306, %v397
        %399 = vmatmul.f32.gmra.mxu0 %v249
        %v400 = vpop.f32.mrf.mxu0
        %v401 = vadd.f32 %v306, %v400
        %402 = vmatmul.f32.gmra.mxu0 %v250
        %v403 = vpop.f32.mrf.mxu0
        %v404 = vadd.f32 %v306, %v403
        %405 = vmatmul.f32.gmra.mxu0 %v251
        %v406 = vpop.f32.mrf.mxu0
        %v407 = vadd.f32 %v306, %v406
        %408 = vmatmul.f32.gmra.mxu0 %v252
        %v409 = vpop.f32.mrf.mxu0
        %v410 = vadd.f32 %v306, %v409
        %411 = vmatmul.f32.gmra.mxu0 %v253
        %v412 = vpop.f32.mrf.mxu0
        %v413 = vadd.f32 %v306, %v412
        %414 = vmatmul.f32.gmra.mxu0 %v254
        %v415 = vpop.f32.mrf.mxu0
        %v416 = vadd.f32 %v306, %v415
        %417 = vmatmul.f32.gmra.mxu0 %v255
        %v418 = vpop.f32.mrf.mxu0
        %v419 = vadd.f32 %v306, %v418
        %420 = vmatmul.f32.gmra.mxu0 %v256
        %v421 = vpop.f32.mrf.mxu0
        %v422 = vadd.f32 %v306, %v421
        %423 = vmatmul.f32.gmra.mxu0 %v257
        %v424 = vpop.f32.mrf.mxu0
        %v425 = vadd.f32 %v306, %v424
        %426 = vmatmul.f32.gmra.mxu0 %v258
        %v427 = vpop.f32.mrf.mxu0
        %v428 = vadd.f32 %v306, %v427
        %429 = vmatmul.f32.gmra.mxu0 %v259
        %v430 = vpop.f32.mrf.mxu0
        %v431 = vadd.f32 %v306, %v430
        %432 = vmatmul.f32.gmra.mxu0 %v260
        %v433 = vpop.f32.mrf.mxu0
        %v434 = vadd.f32 %v306, %v433
        %435 = vmatmul.f32.gmra.mxu0 %v261
        %v436 = vpop.f32.mrf.mxu0
        %v437 = vadd.f32 %v306, %v436
        %438 = vmatmul.f32.gmra.mxu0 %v262
        %v439 = vpop.f32.mrf.mxu0
        %v440 = vadd.f32 %v306, %v439
        %441 = vmatmul.f32.gmra.mxu0 %v263
        %v442 = vpop.f32.mrf.mxu0
        %v443 = vadd.f32 %v306, %v442
        %444 = vmatmul.f32.gmra.mxu0 %v264
        %v445 = vpop.f32.mrf.mxu0
        %v446 = vadd.f32 %v306, %v445
        %447 = vmatmul.f32.gmra.mxu0 %v265
        %v448 = vpop.f32.mrf.mxu0
        %v449 = vadd.f32 %v306, %v448
        %450 = vmatmul.f32.gmra.mxu0 %v266
        %v451 = vpop.f32.mrf.mxu0
        %v452 = vadd.f32 %v306, %v451
        %453 = vmatmul.f32.gmra.mxu0 %v267
        %v454 = vpop.f32.mrf.mxu0
        %v455 = vadd.f32 %v306, %v454
        %456 = vmatmul.f32.gmra.mxu0 %v268
        %v457 = vpop.f32.mrf.mxu0
        %v458 = vadd.f32 %v306, %v457
        %459 = vmatmul.f32.gmra.mxu0 %v269
        %v460 = vpop.f32.mrf.mxu0
        %v461 = vadd.f32 %v306, %v460
        %462 = vmatmul.f32.gmra.mxu0 %v270
        %v463 = vpop.f32.mrf.mxu0
        %v464 = vadd.f32 %v306, %v463
        %465 = vmatmul.f32.gmra.mxu0 %v271
        %v466 = vpop.f32.mrf.mxu0
        %v467 = vadd.f32 %v306, %v466
        %468 = vmatmul.f32.gmra.mxu0 %v272
        %v469 = vpop.f32.mrf.mxu0
        %v470 = vadd.f32 %v306, %v469
        %471 = vmatmul.f32.gmra.mxu0 %v273
        %v472 = vpop.f32.mrf.mxu0
        %v473 = vadd.f32 %v306, %v472
        %474 = vmatmul.f32.gmra.mxu0 %v274
        %v475 = vpop.f32.mrf.mxu0
        %v476 = vadd.f32 %v306, %v475
        %477 = vmatmul.f32.gmra.mxu0 %v275
        %v478 = vpop.f32.mrf.mxu0
        %v479 = vadd.f32 %v306, %v478
        %480 = vmatmul.f32.gmra.mxu0 %v276
        %v481 = vpop.f32.mrf.mxu0
        %v482 = vadd.f32 %v306, %v481
        %483 = vmatmul.f32.gmra.mxu0 %v277
        %v484 = vpop.f32.mrf.mxu0
        %v485 = vadd.f32 %v306, %v484
        %486 = vmatmul.f32.gmra.mxu0 %v278
        %v487 = vpop.f32.mrf.mxu0
        %v488 = vadd.f32 %v306, %v487
        %489 = vmatmul.f32.gmra.mxu0 %v279
        %v490 = vpop.f32.mrf.mxu0
        %v491 = vadd.f32 %v306, %v490
        %492 = vmatmul.f32.gmra.mxu0 %v280
        %v493 = vpop.f32.mrf.mxu0
        %v494 = vadd.f32 %v306, %v493
        %495 = vmatmul.f32.gmra.mxu0 %v281
        %v496 = vpop.f32.mrf.mxu0
        %v497 = vadd.f32 %v306, %v496
        %498 = vmatmul.f32.gmra.mxu0 %v282
        %v499 = vpop.f32.mrf.mxu0
        %v500 = vadd.f32 %v306, %v499
        %501 = vmatmul.f32.gmra.mxu0 %v283
        %v502 = vpop.f32.mrf.mxu0
        %v503 = vadd.f32 %v306, %v502
        %504 = vmatmul.f32.gmra.mxu0 %v284
        %v505 = vpop.f32.mrf.mxu0
        %v506 = vadd.f32 %v306, %v505
        %507 = vmatmul.f32.gmra.mxu0 %v285
        %v508 = vpop.f32.mrf.mxu0
        %v509 = vadd.f32 %v306, %v508
        %510 = vmatmul.f32.gmra.mxu0 %v286
        %v511 = vpop.f32.mrf.mxu0
        %v512 = vadd.f32 %v306, %v511
        %513 = vmatmul.f32.gmra.mxu0 %v287
        %v514 = vpop.f32.mrf.mxu0
        %v515 = vadd.f32 %v306, %v514
        %516 = vdwg.mxu0
        %v517 = vmax.f32 %v326, 0.0
        %v518 = vmax.f32 %v329, 0.0
        %v519 = vmax.f32 %v332, 0.0
        %v520 = vmax.f32 %v335, 0.0
        %v521 = vmax.f32 %v338, 0.0
        %v522 = vmax.f32 %v341, 0.0
        %v523 = vmax.f32 %v344, 0.0
        %v524 = vmax.f32 %v347, 0.0
        %v525 = vmax.f32 %v350, 0.0
        %v526 = vmax.f32 %v353, 0.0
        %v527 = vmax.f32 %v356, 0.0
        %v528 = vmax.f32 %v359, 0.0
        %v529 = vmax.f32 %v362, 0.0
        %v530 = vmax.f32 %v365, 0.0
        %v531 = vmax.f32 %v368, 0.0
        %v532 = vmax.f32 %v371, 0.0
        %v533 = vmax.f32 %v374, 0.0
        %v534 = vmax.f32 %v377, 0.0
        %v535 = vmax.f32 %v380, 0.0
        %v536 = vmax.f32 %v383, 0.0
        %v537 = vmax.f32 %v386, 0.0
        %v538 = vmax.f32 %v389, 0.0
        %v539 = vmax.f32 %v392, 0.0
        %v540 = vmax.f32 %v395, 0.0
        %v541 = vmax.f32 %v398, 0.0
        %v542 = vmax.f32 %v401, 0.0
        %v543 = vmax.f32 %v404, 0.0
        %v544 = vmax.f32 %v407, 0.0
        %v545 = vmax.f32 %v410, 0.0
        %v546 = vmax.f32 %v413, 0.0
        %v547 = vmax.f32 %v416, 0.0
        %v548 = vmax.f32 %v419, 0.0
        %v549 = vmax.f32 %v422, 0.0
        %v550 = vmax.f32 %v425, 0.0
        %v551 = vmax.f32 %v428, 0.0
        %v552 = vmax.f32 %v431, 0.0
        %v553 = vmax.f32 %v434, 0.0
        %v554 = vmax.f32 %v437, 0.0
        %v555 = vmax.f32 %v440, 0.0
        %v556 = vmax.f32 %v443, 0.0
        %v557 = vmax.f32 %v446, 0.0
        %v558 = vmax.f32 %v449, 0.0
        %v559 = vmax.f32 %v452, 0.0
        %v560 = vmax.f32 %v455, 0.0
        %v561 = vmax.f32 %v458, 0.0
        %v562 = vmax.f32 %v461, 0.0
        %v563 = vmax.f32 %v464, 0.0
        %v564 = vmax.f32 %v467, 0.0
        %v565 = vmax.f32 %v470, 0.0
        %v566 = vmax.f32 %v473, 0.0
        %v567 = vmax.f32 %v476, 0.0
        %v568 = vmax.f32 %v479, 0.0
        %v569 = vmax.f32 %v482, 0.0
        %v570 = vmax.f32 %v485, 0.0
        %v571 = vmax.f32 %v488, 0.0
        %v572 = vmax.f32 %v491, 0.0
        %v573 = vmax.f32 %v494, 0.0
        %v574 = vmax.f32 %v497, 0.0
        %v575 = vmax.f32 %v500, 0.0
        %v576 = vmax.f32 %v503, 0.0
        %v577 = vmax.f32 %v506, 0.0
        %v578 = vmax.f32 %v509, 0.0
        %v579 = vmax.f32 %v512, 0.0
        %v580 = vmax.f32 %v515, 0.0
        %581 = vst [vmem:[%s221] sm:$0xff] %v517
        %582 = vst [vmem:[%s221 + $0x10] sm:$0xff] %v518
        %583 = vst [vmem:[%s221 + $0x20] sm:$0xff] %v519
        %584 = vst [vmem:[%s221 + $0x30] sm:$0xff] %v520
        %585 = vst [vmem:[%s221 + $0x40] sm:$0xff] %v521
        %586 = vst [vmem:[%s221 + $0x50] sm:$0xff] %v522
        %587 = vst [vmem:[%s221 + $0x60] sm:$0xff] %v523
        %588 = vst [vmem:[%s221 + $0x70] sm:$0xff] %v524
        %589 = vst [vmem:[%s221 + $0x100] sm:$0xff] %v525
        %590 = vst [vmem:[%s221 + $0x110] sm:$0xff] %v526
        %591 = vst [vmem:[%s221 + $0x120] sm:$0xff] %v527
        %592 = vst [vmem:[%s221 + $0x130] sm:$0xff] %v528
        %593 = vst [vmem:[%s221 + $0x140] sm:$0xff] %v529
        %594 = vst [vmem:[%s221 + $0x150] sm:$0xff] %v530
        %595 = vst [vmem:[%s221 + $0x160] sm:$0xff] %v531
        %596 = vst [vmem:[%s221 + $0x170] sm:$0xff] %v532
        %597 = vst [vmem:[%s221 + $0x200] sm:$0xff] %v533
        %598 = vst [vmem:[%s221 + $0x210] sm:$0xff] %v534
        %599 = vst [vmem:[%s221 + $0x220] sm:$0xff] %v535
        %600 = vst [vmem:[%s221 + $0x230] sm:$0xff] %v536
        %601 = vst [vmem:[%s221 + $0x240] sm:$0xff] %v537
        %602 = vst [vmem:[%s221 + $0x250] sm:$0xff] %v538
        %603 = vst [vmem:[%s221 + $0x260] sm:$0xff] %v539
        %604 = vst [vmem:[%s221 + $0x270] sm:$0xff] %v540
        %605 = vst [vmem:[%s221 + $0x300] sm:$0xff] %v541
        %606 = vst [vmem:[%s221 + $0x310] sm:$0xff] %v542
        %607 = vst [vmem:[%s221 + $0x320] sm:$0xff] %v543
        %608 = vst [vmem:[%s221 + $0x330] sm:$0xff] %v544
        %609 = vst [vmem:[%s221 + $0x340] sm:$0xff] %v545
        %610 = vst [vmem:[%s221 + $0x350] sm:$0xff] %v546
        %611 = vst [vmem:[%s221 + $0x360] sm:$0xff] %v547
        %612 = vst [vmem:[%s221 + $0x370] sm:$0xff] %v548
        %613 = vst [vmem:[%s221 + $0x400] sm:$0xff] %v549
        %614 = vst [vmem:[%s221 + $0x410] sm:$0xff] %v550
        %615 = vst [vmem:[%s221 + $0x420] sm:$0xff] %v551
        %616 = vst [vmem:[%s221 + $0x430] sm:$0xff] %v552
        %617 = vst [vmem:[%s221 + $0x440] sm:$0xff] %v553
        %618 = vst [vmem:[%s221 + $0x450] sm:$0xff] %v554
        %619 = vst [vmem:[%s221 + $0x460] sm:$0xff] %v555
        %620 = vst [vmem:[%s221 + $0x470] sm:$0xff] %v556
        %621 = vst [vmem:[%s221 + $0x500] sm:$0xff] %v557
        %622 = vst [vmem:[%s221 + $0x510] sm:$0xff] %v558
        %623 = vst [vmem:[%s221 + $0x520] sm:$0xff] %v559
        %624 = vst [vmem:[%s221 + $0x530] sm:$0xff] %v560
        %625 = vst [vmem:[%s221 + $0x540] sm:$0xff] %v561
        %626 = vst [vmem:[%s221 + $0x550] sm:$0xff] %v562
        %627 = vst [vmem:[%s221 + $0x560] sm:$0xff] %v563
        %628 = vst [vmem:[%s221 + $0x570] sm:$0xff] %v564
        %629 = vst [vmem:[%s221 + $0x600] sm:$0xff] %v565
        %630 = vst [vmem:[%s221 + $0x610] sm:$0xff] %v566
        %631 = vst [vmem:[%s221 + $0x620] sm:$0xff] %v567
        %632 = vst [vmem:[%s221 + $0x630] sm:$0xff] %v568
        %633 = vst [vmem:[%s221 + $0x640] sm:$0xff] %v569
        %634 = vst [vmem:[%s221 + $0x650] sm:$0xff] %v570
        %635 = vst [vmem:[%s221 + $0x660] sm:$0xff] %v571
        %636 = vst [vmem:[%s221 + $0x670] sm:$0xff] %v572
        %637 = vst [vmem:[%s221 + $0x700] sm:$0xff] %v573
        %638 = vst [vmem:[%s221 + $0x710] sm:$0xff] %v574
        %639 = vst [vmem:[%s221 + $0x720] sm:$0xff] %v575
        %640 = vst [vmem:[%s221 + $0x730] sm:$0xff] %v576
        %641 = vst [vmem:[%s221 + $0x740] sm:$0xff] %v577
        %642 = vst [vmem:[%s221 + $0x750] sm:$0xff] %v578
        %643 = vst [vmem:[%s221 + $0x760] sm:$0xff] %v579
        %644 = vst [vmem:[%s221 + $0x770] sm:$0xff] %v580
        %s645 = scalar_lea.vmem [#allocation5], 128
        %v646 = vld [vmem:[%s645] sm:$0xff]
        %v647 = vld [vmem:[%s645 + $0x8] sm:$0xff]
        %v648 = vld [vmem:[%s645 + $0x10] sm:$0xff]
        %v649 = vld [vmem:[%s645 + $0x18] sm:$0xff]
        %v650 = vld [vmem:[%s645 + $0x20] sm:$0xff]
        %v651 = vld [vmem:[%s645 + $0x28] sm:$0xff]
        %v652 = vld [vmem:[%s645 + $0x30] sm:$0xff]
        %v653 = vld [vmem:[%s645 + $0x38] sm:$0xff]
        %v654 = vld [vmem:[%s645 + $0x40] sm:$0xff]
        %v655 = vld [vmem:[%s645 + $0x48] sm:$0xff]
        %v656 = vld [vmem:[%s645 + $0x50] sm:$0xff]
        %v657 = vld [vmem:[%s645 + $0x58] sm:$0xff]
        %v658 = vld [vmem:[%s645 + $0x60] sm:$0xff]
        %v659 = vld [vmem:[%s645 + $0x68] sm:$0xff]
        %v660 = vld [vmem:[%s645 + $0x70] sm:$0xff]
        %v661 = vld [vmem:[%s645 + $0x78] sm:$0xff]
        %662 = vmatpush.msra.mxu0 %v661
        %663 = vmatpush.msra.mxu0 %v660
        %664 = vmatpush.msra.mxu0 %v659
        %665 = vmatpush.msra.mxu0 %v658
        %666 = vmatpush.msra.mxu0 %v657
        %667 = vmatpush.msra.mxu0 %v656
        %668 = vmatpush.msra.mxu0 %v655
        %669 = vmatpush.msra.mxu0 %v654
        %670 = vmatpush.msra.mxu0 %v653
        %671 = vmatpush.msra.mxu0 %v652
        %672 = vmatpush.msra.mxu0 %v651
        %673 = vmatpush.msra.mxu0 %v650
        %674 = vmatpush.msra.mxu0 %v649
        %675 = vmatpush.msra.mxu0 %v648
        %676 = vmatpush.msra.mxu0 %v647
        %677 = vmatpush.msra.mxu0 %v646
        %678 = vmatmul.f32.gmra.mxu0 %v224
        %v679 = vpop.f32.mrf.mxu0
        %v680 = vadd.f32 %v306, %v679
        %681 = vmatmul.f32.gmra.mxu0 %v225
        %v682 = vpop.f32.mrf.mxu0
        %v683 = vadd.f32 %v306, %v682
        %684 = vmatmul.f32.gmra.mxu0 %v226
        %v685 = vpop.f32.mrf.mxu0
        %v686 = vadd.f32 %v306, %v685
        %687 = vmatmul.f32.gmra.mxu0 %v227
        %v688 = vpop.f32.mrf.mxu0
        %v689 = vadd.f32 %v306, %v688
        %690 = vmatmul.f32.gmra.mxu0 %v228
        %v691 = vpop.f32.mrf.mxu0
        %v692 = vadd.f32 %v306, %v691
        %693 = vmatmul.f32.gmra.mxu0 %v229
        %v694 = vpop.f32.mrf.mxu0
        %v695 = vadd.f32 %v306, %v694
        %696 = vmatmul.f32.gmra.mxu0 %v230
        %v697 = vpop.f32.mrf.mxu0
        %v698 = vadd.f32 %v306, %v697
        %699 = vmatmul.f32.gmra.mxu0 %v231
        %v700 = vpop.f32.mrf.mxu0
        %v701 = vadd.f32 %v306, %v700
        %702 = vmatmul.f32.gmra.mxu0 %v232
        %v703 = vpop.f32.mrf.mxu0
        %v704 = vadd.f32 %v306, %v703
        %705 = vmatmul.f32.gmra.mxu0 %v233
        %v706 = vpop.f32.mrf.mxu0
        %v707 = vadd.f32 %v306, %v706
        %708 = vmatmul.f32.gmra.mxu0 %v234
        %v709 = vpop.f32.mrf.mxu0
        %v710 = vadd.f32 %v306, %v709
        %711 = vmatmul.f32.gmra.mxu0 %v235
        %v712 = vpop.f32.mrf.mxu0
        %v713 = vadd.f32 %v306, %v712
        %714 = vmatmul.f32.gmra.mxu0 %v236
        %v715 = vpop.f32.mrf.mxu0
        %v716 = vadd.f32 %v306, %v715
        %717 = vmatmul.f32.gmra.mxu0 %v237
        %v718 = vpop.f32.mrf.mxu0
        %v719 = vadd.f32 %v306, %v718
        %720 = vmatmul.f32.gmra.mxu0 %v238
        %v721 = vpop.f32.mrf.mxu0
        %v722 = vadd.f32 %v306, %v721
        %723 = vmatmul.f32.gmra.mxu0 %v239
        %v724 = vpop.f32.mrf.mxu0
        %v725 = vadd.f32 %v306, %v724
        %726 = vmatmul.f32.gmra.mxu0 %v240
        %v727 = vpop.f32.mrf.mxu0
        %v728 = vadd.f32 %v306, %v727
        %729 = vmatmul.f32.gmra.mxu0 %v241
        %v730 = vpop.f32.mrf.mxu0
        %v731 = vadd.f32 %v306, %v730
        %732 = vmatmul.f32.gmra.mxu0 %v242
        %v733 = vpop.f32.mrf.mxu0
        %v734 = vadd.f32 %v306, %v733
        %735 = vmatmul.f32.gmra.mxu0 %v243
        %v736 = vpop.f32.mrf.mxu0
        %v737 = vadd.f32 %v306, %v736
        %738 = vmatmul.f32.gmra.mxu0 %v244
        %v739 = vpop.f32.mrf.mxu0
        %v740 = vadd.f32 %v306, %v739
        %741 = vmatmul.f32.gmra.mxu0 %v245
        %v742 = vpop.f32.mrf.mxu0
        %v743 = vadd.f32 %v306, %v742
        %744 = vmatmul.f32.gmra.mxu0 %v246
        %v745 = vpop.f32.mrf.mxu0
        %v746 = vadd.f32 %v306, %v745
        %747 = vmatmul.f32.gmra.mxu0 %v247
        %v748 = vpop.f32.mrf.mxu0
        %v749 = vadd.f32 %v306, %v748
        %750 = vmatmul.f32.gmra.mxu0 %v248
        %v751 = vpop.f32.mrf.mxu0
        %v752 = vadd.f32 %v306, %v751
        %753 = vmatmul.f32.gmra.mxu0 %v249
        %v754 = vpop.f32.mrf.mxu0
        %v755 = vadd.f32 %v306, %v754
        %756 = vmatmul.f32.gmra.mxu0 %v250
        %v757 = vpop.f32.mrf.mxu0
        %v758 = vadd.f32 %v306, %v757
        %759 = vmatmul.f32.gmra.mxu0 %v251
        %v760 = vpop.f32.mrf.mxu0
        %v761 = vadd.f32 %v306, %v760
        %762 = vmatmul.f32.gmra.mxu0 %v252
        %v763 = vpop.f32.mrf.mxu0
        %v764 = vadd.f32 %v306, %v763
        %765 = vmatmul.f32.gmra.mxu0 %v253
        %v766 = vpop.f32.mrf.mxu0
        %v767 = vadd.f32 %v306, %v766
        %768 = vmatmul.f32.gmra.mxu0 %v254
        %v769 = vpop.f32.mrf.mxu0
        %v770 = vadd.f32 %v306, %v769
        %771 = vmatmul.f32.gmra.mxu0 %v255
        %v772 = vpop.f32.mrf.mxu0
        %v773 = vadd.f32 %v306, %v772
        %774 = vmatmul.f32.gmra.mxu0 %v256
        %v775 = vpop.f32.mrf.mxu0
        %v776 = vadd.f32 %v306, %v775
        %777 = vmatmul.f32.gmra.mxu0 %v257
        %v778 = vpop.f32.mrf.mxu0
        %v779 = vadd.f32 %v306, %v778
        %780 = vmatmul.f32.gmra.mxu0 %v258
        %v781 = vpop.f32.mrf.mxu0
        %v782 = vadd.f32 %v306, %v781
        %783 = vmatmul.f32.gmra.mxu0 %v259
        %v784 = vpop.f32.mrf.mxu0
        %v785 = vadd.f32 %v306, %v784
        %786 = vmatmul.f32.gmra.mxu0 %v260
        %v787 = vpop.f32.mrf.mxu0
        %v788 = vadd.f32 %v306, %v787
        %789 = vmatmul.f32.gmra.mxu0 %v261
        %v790 = vpop.f32.mrf.mxu0
        %v791 = vadd.f32 %v306, %v790
        %792 = vmatmul.f32.gmra.mxu0 %v262
        %v793 = vpop.f32.mrf.mxu0
        %v794 = vadd.f32 %v306, %v793
        %795 = vmatmul.f32.gmra.mxu0 %v263
        %v796 = vpop.f32.mrf.mxu0
        %v797 = vadd.f32 %v306, %v796
        %798 = vmatmul.f32.gmra.mxu0 %v264
        %v799 = vpop.f32.mrf.mxu0
        %v800 = vadd.f32 %v306, %v799
        %801 = vmatmul.f32.gmra.mxu0 %v265
        %v802 = vpop.f32.mrf.mxu0
        %v803 = vadd.f32 %v306, %v802
        %804 = vmatmul.f32.gmra.mxu0 %v266
        %v805 = vpop.f32.mrf.mxu0
        %v806 = vadd.f32 %v306, %v805
        %807 = vmatmul.f32.gmra.mxu0 %v267
        %v808 = vpop.f32.mrf.mxu0
        %v809 = vadd.f32 %v306, %v808
        %810 = vmatmul.f32.gmra.mxu0 %v268
        %v811 = vpop.f32.mrf.mxu0
        %v812 = vadd.f32 %v306, %v811
        %813 = vmatmul.f32.gmra.mxu0 %v269
        %v814 = vpop.f32.mrf.mxu0
        %v815 = vadd.f32 %v306, %v814
        %816 = vmatmul.f32.gmra.mxu0 %v270
        %v817 = vpop.f32.mrf.mxu0
        %v818 = vadd.f32 %v306, %v817
        %819 = vmatmul.f32.gmra.mxu0 %v271
        %v820 = vpop.f32.mrf.mxu0
        %v821 = vadd.f32 %v306, %v820
        %822 = vmatmul.f32.gmra.mxu0 %v272
        %v823 = vpop.f32.mrf.mxu0
        %v824 = vadd.f32 %v306, %v823
        %825 = vmatmul.f32.gmra.mxu0 %v273
        %v826 = vpop.f32.mrf.mxu0
        %v827 = vadd.f32 %v306, %v826
        %828 = vmatmul.f32.gmra.mxu0 %v274
        %v829 = vpop.f32.mrf.mxu0
        %v830 = vadd.f32 %v306, %v829
        %831 = vmatmul.f32.gmra.mxu0 %v275
        %v832 = vpop.f32.mrf.mxu0
        %v833 = vadd.f32 %v306, %v832
        %834 = vmatmul.f32.gmra.mxu0 %v276
        %v835 = vpop.f32.mrf.mxu0
        %v836 = vadd.f32 %v306, %v835
        %837 = vmatmul.f32.gmra.mxu0 %v277
        %v838 = vpop.f32.mrf.mxu0
        %v839 = vadd.f32 %v306, %v838
        %840 = vmatmul.f32.gmra.mxu0 %v278
        %v841 = vpop.f32.mrf.mxu0
        %v842 = vadd.f32 %v306, %v841
        %843 = vmatmul.f32.gmra.mxu0 %v279
        %v844 = vpop.f32.mrf.mxu0
        %v845 = vadd.f32 %v306, %v844
        %846 = vmatmul.f32.gmra.mxu0 %v280
        %v847 = vpop.f32.mrf.mxu0
        %v848 = vadd.f32 %v306, %v847
        %849 = vmatmul.f32.gmra.mxu0 %v281
        %v850 = vpop.f32.mrf.mxu0
        %v851 = vadd.f32 %v306, %v850
        %852 = vmatmul.f32.gmra.mxu0 %v282
        %v853 = vpop.f32.mrf.mxu0
        %v854 = vadd.f32 %v306, %v853
        %855 = vmatmul.f32.gmra.mxu0 %v283
        %v856 = vpop.f32.mrf.mxu0
        %v857 = vadd.f32 %v306, %v856
        %858 = vmatmul.f32.gmra.mxu0 %v284
        %v859 = vpop.f32.mrf.mxu0
        %v860 = vadd.f32 %v306, %v859
        %861 = vmatmul.f32.gmra.mxu0 %v285
        %v862 = vpop.f32.mrf.mxu0
        %v863 = vadd.f32 %v306, %v862
        %864 = vmatmul.f32.gmra.mxu0 %v286
        %v865 = vpop.f32.mrf.mxu0
        %v866 = vadd.f32 %v306, %v865
        %867 = vmatmul.f32.gmra.mxu0 %v287
        %v868 = vpop.f32.mrf.mxu0
        %v869 = vadd.f32 %v306, %v868
        %870 = vdwg.mxu0
        %v871 = vmax.f32 %v680, 0.0
        %v872 = vmax.f32 %v683, 0.0
        %v873 = vmax.f32 %v686, 0.0
        %v874 = vmax.f32 %v689, 0.0
        %v875 = vmax.f32 %v692, 0.0
        %v876 = vmax.f32 %v695, 0.0
        %v877 = vmax.f32 %v698, 0.0
        %v878 = vmax.f32 %v701, 0.0
        %v879 = vmax.f32 %v704, 0.0
        %v880 = vmax.f32 %v707, 0.0
        %v881 = vmax.f32 %v710, 0.0
        %v882 = vmax.f32 %v713, 0.0
        %v883 = vmax.f32 %v716, 0.0
        %v884 = vmax.f32 %v719, 0.0
        %v885 = vmax.f32 %v722, 0.0
        %v886 = vmax.f32 %v725, 0.0
        %v887 = vmax.f32 %v728, 0.0
        %v888 = vmax.f32 %v731, 0.0
        %v889 = vmax.f32 %v734, 0.0
        %v890 = vmax.f32 %v737, 0.0
        %v891 = vmax.f32 %v740, 0.0
        %v892 = vmax.f32 %v743, 0.0
        %v893 = vmax.f32 %v746, 0.0
        %v894 = vmax.f32 %v749, 0.0
        %v895 = vmax.f32 %v752, 0.0
        %v896 = vmax.f32 %v755, 0.0
        %v897 = vmax.f32 %v758, 0.0
        %v898 = vmax.f32 %v761, 0.0
        %v899 = vmax.f32 %v764, 0.0
        %v900 = vmax.f32 %v767, 0.0
        %v901 = vmax.f32 %v770, 0.0
        %v902 = vmax.f32 %v773, 0.0
        %v903 = vmax.f32 %v776, 0.0
        %v904 = vmax.f32 %v779, 0.0
        %v905 = vmax.f32 %v782, 0.0
        %v906 = vmax.f32 %v785, 0.0
        %v907 = vmax.f32 %v788, 0.0
        %v908 = vmax.f32 %v791, 0.0
        %v909 = vmax.f32 %v794, 0.0
        %v910 = vmax.f32 %v797, 0.0
        %v911 = vmax.f32 %v800, 0.0
        %v912 = vmax.f32 %v803, 0.0
        %v913 = vmax.f32 %v806, 0.0
        %v914 = vmax.f32 %v809, 0.0
        %v915 = vmax.f32 %v812, 0.0
        %v916 = vmax.f32 %v815, 0.0
        %v917 = vmax.f32 %v818, 0.0
        %v918 = vmax.f32 %v821, 0.0
        %v919 = vmax.f32 %v824, 0.0
        %v920 = vmax.f32 %v827, 0.0
        %v921 = vmax.f32 %v830, 0.0
        %v922 = vmax.f32 %v833, 0.0
        %v923 = vmax.f32 %v836, 0.0
        %v924 = vmax.f32 %v839, 0.0
        %v925 = vmax.f32 %v842, 0.0
        %v926 = vmax.f32 %v845, 0.0
        %v927 = vmax.f32 %v848, 0.0
        %v928 = vmax.f32 %v851, 0.0
        %v929 = vmax.f32 %v854, 0.0
        %v930 = vmax.f32 %v857, 0.0
        %v931 = vmax.f32 %v860, 0.0
        %v932 = vmax.f32 %v863, 0.0
        %v933 = vmax.f32 %v866, 0.0
        %v934 = vmax.f32 %v869, 0.0
        %s935 = scalar_lea.vmem %s221, 8 [#allocation8]
        %936 = vst [vmem:[%s935] sm:$0xff] %v871
        %937 = vst [vmem:[%s935 + $0x10] sm:$0xff] %v872
        %938 = vst [vmem:[%s935 + $0x20] sm:$0xff] %v873
        %939 = vst [vmem:[%s935 + $0x30] sm:$0xff] %v874
        %940 = vst [vmem:[%s935 + $0x40] sm:$0xff] %v875
        %941 = vst [vmem:[%s935 + $0x50] sm:$0xff] %v876
        %942 = vst [vmem:[%s935 + $0x60] sm:$0xff] %v877
        %943 = vst [vmem:[%s935 + $0x70] sm:$0xff] %v878
        %944 = vst [vmem:[%s935 + $0x100] sm:$0xff] %v879
        %945 = vst [vmem:[%s935 + $0x110] sm:$0xff] %v880
        %946 = vst [vmem:[%s935 + $0x120] sm:$0xff] %v881
        %947 = vst [vmem:[%s935 + $0x130] sm:$0xff] %v882
        %948 = vst [vmem:[%s935 + $0x140] sm:$0xff] %v883
        %949 = vst [vmem:[%s935 + $0x150] sm:$0xff] %v884
        %950 = vst [vmem:[%s935 + $0x160] sm:$0xff] %v885
        %951 = vst [vmem:[%s935 + $0x170] sm:$0xff] %v886
        %952 = vst [vmem:[%s935 + $0x200] sm:$0xff] %v887
        %953 = vst [vmem:[%s935 + $0x210] sm:$0xff] %v888
        %954 = vst [vmem:[%s935 + $0x220] sm:$0xff] %v889
        %955 = vst [vmem:[%s935 + $0x230] sm:$0xff] %v890
        %956 = vst [vmem:[%s935 + $0x240] sm:$0xff] %v891
        %957 = vst [vmem:[%s935 + $0x250] sm:$0xff] %v892
        %958 = vst [vmem:[%s935 + $0x260] sm:$0xff] %v893
        %959 = vst [vmem:[%s935 + $0x270] sm:$0xff] %v894
        %960 = vst [vmem:[%s935 + $0x300] sm:$0xff] %v895
        %961 = vst [vmem:[%s935 + $0x310] sm:$0xff] %v896
        %962 = vst [vmem:[%s935 + $0x320] sm:$0xff] %v897
        %963 = vst [vmem:[%s935 + $0x330] sm:$0xff] %v898
        %964 = vst [vmem:[%s935 + $0x340] sm:$0xff] %v899
        %965 = vst [vmem:[%s935 + $0x350] sm:$0xff] %v900
        %966 = vst [vmem:[%s935 + $0x360] sm:$0xff] %v901
        %967 = vst [vmem:[%s935 + $0x370] sm:$0xff] %v902
        %968 = vst [vmem:[%s935 + $0x400] sm:$0xff] %v903
        %969 = vst [vmem:[%s935 + $0x410] sm:$0xff] %v904
        %970 = vst [vmem:[%s935 + $0x420] sm:$0xff] %v905
        %971 = vst [vmem:[%s935 + $0x430] sm:$0xff] %v906
        %972 = vst [vmem:[%s935 + $0x440] sm:$0xff] %v907
        %973 = vst [vmem:[%s935 + $0x450] sm:$0xff] %v908
        %974 = vst [vmem:[%s935 + $0x460] sm:$0xff] %v909
        %975 = vst [vmem:[%s935 + $0x470] sm:$0xff] %v910
        %976 = vst [vmem:[%s935 + $0x500] sm:$0xff] %v911
        %977 = vst [vmem:[%s935 + $0x510] sm:$0xff] %v912
        %978 = vst [vmem:[%s935 + $0x520] sm:$0xff] %v913
        %979 = vst [vmem:[%s935 + $0x530] sm:$0xff] %v914
        %980 = vst [vmem:[%s935 + $0x540] sm:$0xff] %v915
        %981 = vst [vmem:[%s935 + $0x550] sm:$0xff] %v916
        %982 = vst [vmem:[%s935 + $0x560] sm:$0xff] %v917
        %983 = vst [vmem:[%s935 + $0x570] sm:$0xff] %v918
        %984 = vst [vmem:[%s935 + $0x600] sm:$0xff] %v919
        %985 = vst [vmem:[%s935 + $0x610] sm:$0xff] %v920
        %986 = vst [vmem:[%s935 + $0x620] sm:$0xff] %v921
        %987 = vst [vmem:[%s935 + $0x630] sm:$0xff] %v922
        %988 = vst [vmem:[%s935 + $0x640] sm:$0xff] %v923
        %989 = vst [vmem:[%s935 + $0x650] sm:$0xff] %v924
        %990 = vst [vmem:[%s935 + $0x660] sm:$0xff] %v925
        %991 = vst [vmem:[%s935 + $0x670] sm:$0xff] %v926
        %992 = vst [vmem:[%s935 + $0x700] sm:$0xff] %v927
        %993 = vst [vmem:[%s935 + $0x710] sm:$0xff] %v928
        %994 = vst [vmem:[%s935 + $0x720] sm:$0xff] %v929
        %995 = vst [vmem:[%s935 + $0x730] sm:$0xff] %v930
        %996 = vst [vmem:[%s935 + $0x740] sm:$0xff] %v931
        %997 = vst [vmem:[%s935 + $0x750] sm:$0xff] %v932
        %998 = vst [vmem:[%s935 + $0x760] sm:$0xff] %v933
        %999 = vst [vmem:[%s935 + $0x770] sm:$0xff] %v934
        %s1000 = scalar_lea.vmem [#allocation5], 256
        %v1001 = vld [vmem:[%s1000] sm:$0xff]
        %v1002 = vld [vmem:[%s1000 + $0x8] sm:$0xff]
        %v1003 = vld [vmem:[%s1000 + $0x10] sm:$0xff]
        %v1004 = vld [vmem:[%s1000 + $0x18] sm:$0xff]
        %v1005 = vld [vmem:[%s1000 + $0x20] sm:$0xff]
        %v1006 = vld [vmem:[%s1000 + $0x28] sm:$0xff]
        %v1007 = vld [vmem:[%s1000 + $0x30] sm:$0xff]
        %v1008 = vld [vmem:[%s1000 + $0x38] sm:$0xff]
        %v1009 = vld [vmem:[%s1000 + $0x40] sm:$0xff]
        %v1010 = vld [vmem:[%s1000 + $0x48] sm:$0xff]
        %v1011 = vld [vmem:[%s1000 + $0x50] sm:$0xff]
        %v1012 = vld [vmem:[%s1000 + $0x58] sm:$0xff]
        %v1013 = vld [vmem:[%s1000 + $0x60] sm:$0xff]
        %v1014 = vld [vmem:[%s1000 + $0x68] sm:$0xff]
        %v1015 = vld [vmem:[%s1000 + $0x70] sm:$0xff]
        %v1016 = vld [vmem:[%s1000 + $0x78] sm:$0xff]
        %1017 = vmatpush.msra.mxu0 %v1016
        %1018 = vmatpush.msra.mxu0 %v1015
        %1019 = vmatpush.msra.mxu0 %v1014
        %1020 = vmatpush.msra.mxu0 %v1013
        %1021 = vmatpush.msra.mxu0 %v1012
        %1022 = vmatpush.msra.mxu0 %v1011
        %1023 = vmatpush.msra.mxu0 %v1010
        %1024 = vmatpush.msra.mxu0 %v1009
        %1025 = vmatpush.msra.mxu0 %v1008
        %1026 = vmatpush.msra.mxu0 %v1007
        %1027 = vmatpush.msra.mxu0 %v1006
        %1028 = vmatpush.msra.mxu0 %v1005
        %1029 = vmatpush.msra.mxu0 %v1004
        %1030 = vmatpush.msra.mxu0 %v1003
        %1031 = vmatpush.msra.mxu0 %v1002
        %1032 = vmatpush.msra.mxu0 %v1001
        %1033 = vmatmul.f32.gmra.mxu0 %v224
        %v1034 = vpop.f32.mrf.mxu0
        %v1035 = vadd.f32 %v306, %v1034
        %1036 = vmatmul.f32.gmra.mxu0 %v225
        %v1037 = vpop.f32.mrf.mxu0
        %v1038 = vadd.f32 %v306, %v1037
        %1039 = vmatmul.f32.gmra.mxu0 %v226
        %v1040 = vpop.f32.mrf.mxu0
        %v1041 = vadd.f32 %v306, %v1040
        %1042 = vmatmul.f32.gmra.mxu0 %v227
        %v1043 = vpop.f32.mrf.mxu0
        %v1044 = vadd.f32 %v306, %v1043
        %1045 = vmatmul.f32.gmra.mxu0 %v228
        %v1046 = vpop.f32.mrf.mxu0
        %v1047 = vadd.f32 %v306, %v1046
        %1048 = vmatmul.f32.gmra.mxu0 %v229
        %v1049 = vpop.f32.mrf.mxu0
        %v1050 = vadd.f32 %v306, %v1049
        %1051 = vmatmul.f32.gmra.mxu0 %v230
        %v1052 = vpop.f32.mrf.mxu0
        %v1053 = vadd.f32 %v306, %v1052
        %1054 = vmatmul.f32.gmra.mxu0 %v231
        %v1055 = vpop.f32.mrf.mxu0
        %v1056 = vadd.f32 %v306, %v1055
        %1057 = vmatmul.f32.gmra.mxu0 %v232
        %v1058 = vpop.f32.mrf.mxu0
        %v1059 = vadd.f32 %v306, %v1058
        %1060 = vmatmul.f32.gmra.mxu0 %v233
        %v1061 = vpop.f32.mrf.mxu0
        %v1062 = vadd.f32 %v306, %v1061
        %1063 = vmatmul.f32.gmra.mxu0 %v234
        %v1064 = vpop.f32.mrf.mxu0
        %v1065 = vadd.f32 %v306, %v1064
        %1066 = vmatmul.f32.gmra.mxu0 %v235
        %v1067 = vpop.f32.mrf.mxu0
        %v1068 = vadd.f32 %v306, %v1067
        %1069 = vmatmul.f32.gmra.mxu0 %v236
        %v1070 = vpop.f32.mrf.mxu0
        %v1071 = vadd.f32 %v306, %v1070
        %1072 = vmatmul.f32.gmra.mxu0 %v237
        %v1073 = vpop.f32.mrf.mxu0
        %v1074 = vadd.f32 %v306, %v1073
        %1075 = vmatmul.f32.gmra.mxu0 %v238
        %v1076 = vpop.f32.mrf.mxu0
        %v1077 = vadd.f32 %v306, %v1076
        %1078 = vmatmul.f32.gmra.mxu0 %v239
        %v1079 = vpop.f32.mrf.mxu0
        %v1080 = vadd.f32 %v306, %v1079
        %1081 = vmatmul.f32.gmra.mxu0 %v240
        %v1082 = vpop.f32.mrf.mxu0
        %v1083 = vadd.f32 %v306, %v1082
        %1084 = vmatmul.f32.gmra.mxu0 %v241
        %v1085 = vpop.f32.mrf.mxu0
        %v1086 = vadd.f32 %v306, %v1085
        %1087 = vmatmul.f32.gmra.mxu0 %v242
        %v1088 = vpop.f32.mrf.mxu0
        %v1089 = vadd.f32 %v306, %v1088
        %1090 = vmatmul.f32.gmra.mxu0 %v243
        %v1091 = vpop.f32.mrf.mxu0
        %v1092 = vadd.f32 %v306, %v1091
        %1093 = vmatmul.f32.gmra.mxu0 %v244
        %v1094 = vpop.f32.mrf.mxu0
        %v1095 = vadd.f32 %v306, %v1094
        %1096 = vmatmul.f32.gmra.mxu0 %v245
        %v1097 = vpop.f32.mrf.mxu0
        %v1098 = vadd.f32 %v306, %v1097
        %1099 = vmatmul.f32.gmra.mxu0 %v246
        %v1100 = vpop.f32.mrf.mxu0
        %v1101 = vadd.f32 %v306, %v1100
        %1102 = vmatmul.f32.gmra.mxu0 %v247
        %v1103 = vpop.f32.mrf.mxu0
        %v1104 = vadd.f32 %v306, %v1103
        %1105 = vmatmul.f32.gmra.mxu0 %v248
        %v1106 = vpop.f32.mrf.mxu0
        %v1107 = vadd.f32 %v306, %v1106
        %1108 = vmatmul.f32.gmra.mxu0 %v249
        %v1109 = vpop.f32.mrf.mxu0
        %v1110 = vadd.f32 %v306, %v1109
        %1111 = vmatmul.f32.gmra.mxu0 %v250
        %v1112 = vpop.f32.mrf.mxu0
        %v1113 = vadd.f32 %v306, %v1112
        %1114 = vmatmul.f32.gmra.mxu0 %v251
        %v1115 = vpop.f32.mrf.mxu0
        %v1116 = vadd.f32 %v306, %v1115
        %1117 = vmatmul.f32.gmra.mxu0 %v252
        %v1118 = vpop.f32.mrf.mxu0
        %v1119 = vadd.f32 %v306, %v1118
        %1120 = vmatmul.f32.gmra.mxu0 %v253
        %v1121 = vpop.f32.mrf.mxu0
        %v1122 = vadd.f32 %v306, %v1121
        %1123 = vmatmul.f32.gmra.mxu0 %v254
        %v1124 = vpop.f32.mrf.mxu0
        %v1125 = vadd.f32 %v306, %v1124
        %1126 = vmatmul.f32.gmra.mxu0 %v255
        %v1127 = vpop.f32.mrf.mxu0
        %v1128 = vadd.f32 %v306, %v1127
        %1129 = vmatmul.f32.gmra.mxu0 %v256
        %v1130 = vpop.f32.mrf.mxu0
        %v1131 = vadd.f32 %v306, %v1130
        %1132 = vmatmul.f32.gmra.mxu0 %v257
        %v1133 = vpop.f32.mrf.mxu0
        %v1134 = vadd.f32 %v306, %v1133
        %1135 = vmatmul.f32.gmra.mxu0 %v258
        %v1136 = vpop.f32.mrf.mxu0
        %v1137 = vadd.f32 %v306, %v1136
        %1138 = vmatmul.f32.gmra.mxu0 %v259
        %v1139 = vpop.f32.mrf.mxu0
        %v1140 = vadd.f32 %v306, %v1139
        %1141 = vmatmul.f32.gmra.mxu0 %v260
        %v1142 = vpop.f32.mrf.mxu0
        %v1143 = vadd.f32 %v306, %v1142
        %1144 = vmatmul.f32.gmra.mxu0 %v261
        %v1145 = vpop.f32.mrf.mxu0
        %v1146 = vadd.f32 %v306, %v1145
        %1147 = vmatmul.f32.gmra.mxu0 %v262
        %v1148 = vpop.f32.mrf.mxu0
        %v1149 = vadd.f32 %v306, %v1148
        %1150 = vmatmul.f32.gmra.mxu0 %v263
        %v1151 = vpop.f32.mrf.mxu0
        %v1152 = vadd.f32 %v306, %v1151
        %1153 = vmatmul.f32.gmra.mxu0 %v264
        %v1154 = vpop.f32.mrf.mxu0
        %v1155 = vadd.f32 %v306, %v1154
        %1156 = vmatmul.f32.gmra.mxu0 %v265
        %v1157 = vpop.f32.mrf.mxu0
        %v1158 = vadd.f32 %v306, %v1157
        %1159 = vmatmul.f32.gmra.mxu0 %v266
        %v1160 = vpop.f32.mrf.mxu0
        %v1161 = vadd.f32 %v306, %v1160
        %1162 = vmatmul.f32.gmra.mxu0 %v267
        %v1163 = vpop.f32.mrf.mxu0
        %v1164 = vadd.f32 %v306, %v1163
        %1165 = vmatmul.f32.gmra.mxu0 %v268
        %v1166 = vpop.f32.mrf.mxu0
        %v1167 = vadd.f32 %v306, %v1166
        %1168 = vmatmul.f32.gmra.mxu0 %v269
        %v1169 = vpop.f32.mrf.mxu0
        %v1170 = vadd.f32 %v306, %v1169
        %1171 = vmatmul.f32.gmra.mxu0 %v270
        %v1172 = vpop.f32.mrf.mxu0
        %v1173 = vadd.f32 %v306, %v1172
        %1174 = vmatmul.f32.gmra.mxu0 %v271
        %v1175 = vpop.f32.mrf.mxu0
        %v1176 = vadd.f32 %v306, %v1175
        %1177 = vmatmul.f32.gmra.mxu0 %v272
        %v1178 = vpop.f32.mrf.mxu0
        %v1179 = vadd.f32 %v306, %v1178
        %1180 = vmatmul.f32.gmra.mxu0 %v273
        %v1181 = vpop.f32.mrf.mxu0
        %v1182 = vadd.f32 %v306, %v1181
        %1183 = vmatmul.f32.gmra.mxu0 %v274
        %v1184 = vpop.f32.mrf.mxu0
        %v1185 = vadd.f32 %v306, %v1184
        %1186 = vmatmul.f32.gmra.mxu0 %v275
        %v1187 = vpop.f32.mrf.mxu0
        %v1188 = vadd.f32 %v306, %v1187
        %1189 = vmatmul.f32.gmra.mxu0 %v276
        %v1190 = vpop.f32.mrf.mxu0
        %v1191 = vadd.f32 %v306, %v1190
        %1192 = vmatmul.f32.gmra.mxu0 %v277
        %v1193 = vpop.f32.mrf.mxu0
        %v1194 = vadd.f32 %v306, %v1193
        %1195 = vmatmul.f32.gmra.mxu0 %v278
        %v1196 = vpop.f32.mrf.mxu0
        %v1197 = vadd.f32 %v306, %v1196
        %1198 = vmatmul.f32.gmra.mxu0 %v279
        %v1199 = vpop.f32.mrf.mxu0
        %v1200 = vadd.f32 %v306, %v1199
        %1201 = vmatmul.f32.gmra.mxu0 %v280
        %v1202 = vpop.f32.mrf.mxu0
        %v1203 = vadd.f32 %v306, %v1202
        %1204 = vmatmul.f32.gmra.mxu0 %v281
        %v1205 = vpop.f32.mrf.mxu0
        %v1206 = vadd.f32 %v306, %v1205
        %1207 = vmatmul.f32.gmra.mxu0 %v282
        %v1208 = vpop.f32.mrf.mxu0
        %v1209 = vadd.f32 %v306, %v1208
        %1210 = vmatmul.f32.gmra.mxu0 %v283
        %v1211 = vpop.f32.mrf.mxu0
        %v1212 = vadd.f32 %v306, %v1211
        %1213 = vmatmul.f32.gmra.mxu0 %v284
        %v1214 = vpop.f32.mrf.mxu0
        %v1215 = vadd.f32 %v306, %v1214
        %1216 = vmatmul.f32.gmra.mxu0 %v285
        %v1217 = vpop.f32.mrf.mxu0
        %v1218 = vadd.f32 %v306, %v1217
        %1219 = vmatmul.f32.gmra.mxu0 %v286
        %v1220 = vpop.f32.mrf.mxu0
        %v1221 = vadd.f32 %v306, %v1220
        %1222 = vmatmul.f32.gmra.mxu0 %v287
        %v1223 = vpop.f32.mrf.mxu0
        %v1224 = vadd.f32 %v306, %v1223
        %1225 = vdwg.mxu0
        %v1226 = vmax.f32 %v1035, 0.0
        %v1227 = vmax.f32 %v1038, 0.0
        %v1228 = vmax.f32 %v1041, 0.0
        %v1229 = vmax.f32 %v1044, 0.0
        %v1230 = vmax.f32 %v1047, 0.0
        %v1231 = vmax.f32 %v1050, 0.0
        %v1232 = vmax.f32 %v1053, 0.0
        %v1233 = vmax.f32 %v1056, 0.0
        %v1234 = vmax.f32 %v1059, 0.0
        %v1235 = vmax.f32 %v1062, 0.0
        %v1236 = vmax.f32 %v1065, 0.0
        %v1237 = vmax.f32 %v1068, 0.0
        %v1238 = vmax.f32 %v1071, 0.0
        %v1239 = vmax.f32 %v1074, 0.0
        %v1240 = vmax.f32 %v1077, 0.0
        %v1241 = vmax.f32 %v1080, 0.0
        %v1242 = vmax.f32 %v1083, 0.0
        %v1243 = vmax.f32 %v1086, 0.0
        %v1244 = vmax.f32 %v1089, 0.0
        %v1245 = vmax.f32 %v1092, 0.0
        %v1246 = vmax.f32 %v1095, 0.0
        %v1247 = vmax.f32 %v1098, 0.0
        %v1248 = vmax.f32 %v1101, 0.0
        %v1249 = vmax.f32 %v1104, 0.0
        %v1250 = vmax.f32 %v1107, 0.0
        %v1251 = vmax.f32 %v1110, 0.0
        %v1252 = vmax.f32 %v1113, 0.0
        %v1253 = vmax.f32 %v1116, 0.0
        %v1254 = vmax.f32 %v1119, 0.0
        %v1255 = vmax.f32 %v1122, 0.0
        %v1256 = vmax.f32 %v1125, 0.0
        %v1257 = vmax.f32 %v1128, 0.0
        %v1258 = vmax.f32 %v1131, 0.0
        %v1259 = vmax.f32 %v1134, 0.0
        %v1260 = vmax.f32 %v1137, 0.0
        %v1261 = vmax.f32 %v1140, 0.0
        %v1262 = vmax.f32 %v1143, 0.0
        %v1263 = vmax.f32 %v1146, 0.0
        %v1264 = vmax.f32 %v1149, 0.0
        %v1265 = vmax.f32 %v1152, 0.0
        %v1266 = vmax.f32 %v1155, 0.0
        %v1267 = vmax.f32 %v1158, 0.0
        %v1268 = vmax.f32 %v1161, 0.0
        %v1269 = vmax.f32 %v1164, 0.0
        %v1270 = vmax.f32 %v1167, 0.0
        %v1271 = vmax.f32 %v1170, 0.0
        %v1272 = vmax.f32 %v1173, 0.0
        %v1273 = vmax.f32 %v1176, 0.0
        %v1274 = vmax.f32 %v1179, 0.0
        %v1275 = vmax.f32 %v1182, 0.0
        %v1276 = vmax.f32 %v1185, 0.0
        %v1277 = vmax.f32 %v1188, 0.0
        %v1278 = vmax.f32 %v1191, 0.0
        %v1279 = vmax.f32 %v1194, 0.0
        %v1280 = vmax.f32 %v1197, 0.0
        %v1281 = vmax.f32 %v1200, 0.0
        %v1282 = vmax.f32 %v1203, 0.0
        %v1283 = vmax.f32 %v1206, 0.0
        %v1284 = vmax.f32 %v1209, 0.0
        %v1285 = vmax.f32 %v1212, 0.0
        %v1286 = vmax.f32 %v1215, 0.0
        %v1287 = vmax.f32 %v1218, 0.0
        %v1288 = vmax.f32 %v1221, 0.0
        %v1289 = vmax.f32 %v1224, 0.0
        %s1290 = scalar_lea.vmem %s221, 128 [#allocation8]
        %1291 = vst [vmem:[%s1290] sm:$0xff] %v1226
        %1292 = vst [vmem:[%s1290 + $0x10] sm:$0xff] %v1227
        %1293 = vst [vmem:[%s1290 + $0x20] sm:$0xff] %v1228
        %1294 = vst [vmem:[%s1290 + $0x30] sm:$0xff] %v1229
        %1295 = vst [vmem:[%s1290 + $0x40] sm:$0xff] %v1230
        %1296 = vst [vmem:[%s1290 + $0x50] sm:$0xff] %v1231
        %1297 = vst [vmem:[%s1290 + $0x60] sm:$0xff] %v1232
        %1298 = vst [vmem:[%s1290 + $0x70] sm:$0xff] %v1233
        %1299 = vst [vmem:[%s1290 + $0x100] sm:$0xff] %v1234
        %1300 = vst [vmem:[%s1290 + $0x110] sm:$0xff] %v1235
        %1301 = vst [vmem:[%s1290 + $0x120] sm:$0xff] %v1236
        %1302 = vst [vmem:[%s1290 + $0x130] sm:$0xff] %v1237
        %1303 = vst [vmem:[%s1290 + $0x140] sm:$0xff] %v1238
        %1304 = vst [vmem:[%s1290 + $0x150] sm:$0xff] %v1239
        %1305 = vst [vmem:[%s1290 + $0x160] sm:$0xff] %v1240
        %1306 = vst [vmem:[%s1290 + $0x170] sm:$0xff] %v1241
        %1307 = vst [vmem:[%s1290 + $0x200] sm:$0xff] %v1242
        %1308 = vst [vmem:[%s1290 + $0x210] sm:$0xff] %v1243
        %1309 = vst [vmem:[%s1290 + $0x220] sm:$0xff] %v1244
        %1310 = vst [vmem:[%s1290 + $0x230] sm:$0xff] %v1245
        %1311 = vst [vmem:[%s1290 + $0x240] sm:$0xff] %v1246
        %1312 = vst [vmem:[%s1290 + $0x250] sm:$0xff] %v1247
        %1313 = vst [vmem:[%s1290 + $0x260] sm:$0xff] %v1248
        %1314 = vst [vmem:[%s1290 + $0x270] sm:$0xff] %v1249
        %1315 = vst [vmem:[%s1290 + $0x300] sm:$0xff] %v1250
        %1316 = vst [vmem:[%s1290 + $0x310] sm:$0xff] %v1251
        %1317 = vst [vmem:[%s1290 + $0x320] sm:$0xff] %v1252
        %1318 = vst [vmem:[%s1290 + $0x330] sm:$0xff] %v1253
        %1319 = vst [vmem:[%s1290 + $0x340] sm:$0xff] %v1254
        %1320 = vst [vmem:[%s1290 + $0x350] sm:$0xff] %v1255
        %1321 = vst [vmem:[%s1290 + $0x360] sm:$0xff] %v1256
        %1322 = vst [vmem:[%s1290 + $0x370] sm:$0xff] %v1257
        %1323 = vst [vmem:[%s1290 + $0x400] sm:$0xff] %v1258
        %1324 = vst [vmem:[%s1290 + $0x410] sm:$0xff] %v1259
        %1325 = vst [vmem:[%s1290 + $0x420] sm:$0xff] %v1260
        %1326 = vst [vmem:[%s1290 + $0x430] sm:$0xff] %v1261
        %1327 = vst [vmem:[%s1290 + $0x440] sm:$0xff] %v1262
        %1328 = vst [vmem:[%s1290 + $0x450] sm:$0xff] %v1263
        %1329 = vst [vmem:[%s1290 + $0x460] sm:$0xff] %v1264
        %1330 = vst [vmem:[%s1290 + $0x470] sm:$0xff] %v1265
        %1331 = vst [vmem:[%s1290 + $0x500] sm:$0xff] %v1266
        %1332 = vst [vmem:[%s1290 + $0x510] sm:$0xff] %v1267
        %1333 = vst [vmem:[%s1290 + $0x520] sm:$0xff] %v1268
        %1334 = vst [vmem:[%s1290 + $0x530] sm:$0xff] %v1269
        %1335 = vst [vmem:[%s1290 + $0x540] sm:$0xff] %v1270
        %1336 = vst [vmem:[%s1290 + $0x550] sm:$0xff] %v1271
        %1337 = vst [vmem:[%s1290 + $0x560] sm:$0xff] %v1272
        %1338 = vst [vmem:[%s1290 + $0x570] sm:$0xff] %v1273
        %1339 = vst [vmem:[%s1290 + $0x600] sm:$0xff] %v1274
        %1340 = vst [vmem:[%s1290 + $0x610] sm:$0xff] %v1275
        %1341 = vst [vmem:[%s1290 + $0x620] sm:$0xff] %v1276
        %1342 = vst [vmem:[%s1290 + $0x630] sm:$0xff] %v1277
        %1343 = vst [vmem:[%s1290 + $0x640] sm:$0xff] %v1278
        %1344 = vst [vmem:[%s1290 + $0x650] sm:$0xff] %v1279
        %1345 = vst [vmem:[%s1290 + $0x660] sm:$0xff] %v1280
        %1346 = vst [vmem:[%s1290 + $0x670] sm:$0xff] %v1281
        %1347 = vst [vmem:[%s1290 + $0x700] sm:$0xff] %v1282
        %1348 = vst [vmem:[%s1290 + $0x710] sm:$0xff] %v1283
        %1349 = vst [vmem:[%s1290 + $0x720] sm:$0xff] %v1284
        %1350 = vst [vmem:[%s1290 + $0x730] sm:$0xff] %v1285
        %1351 = vst [vmem:[%s1290 + $0x740] sm:$0xff] %v1286
        %1352 = vst [vmem:[%s1290 + $0x750] sm:$0xff] %v1287
        %1353 = vst [vmem:[%s1290 + $0x760] sm:$0xff] %v1288
        %1354 = vst [vmem:[%s1290 + $0x770] sm:$0xff] %v1289
        %s1355 = scalar_lea.vmem [#allocation5], 384
        %v1356 = vld [vmem:[%s1355] sm:$0xff]
        %v1357 = vld [vmem:[%s1355 + $0x8] sm:$0xff]
        %v1358 = vld [vmem:[%s1355 + $0x10] sm:$0xff]
        %v1359 = vld [vmem:[%s1355 + $0x18] sm:$0xff]
        %v1360 = vld [vmem:[%s1355 + $0x20] sm:$0xff]
        %v1361 = vld [vmem:[%s1355 + $0x28] sm:$0xff]
        %v1362 = vld [vmem:[%s1355 + $0x30] sm:$0xff]
        %v1363 = vld [vmem:[%s1355 + $0x38] sm:$0xff]
        %v1364 = vld [vmem:[%s1355 + $0x40] sm:$0xff]
        %v1365 = vld [vmem:[%s1355 + $0x48] sm:$0xff]
        %v1366 = vld [vmem:[%s1355 + $0x50] sm:$0xff]
        %v1367 = vld [vmem:[%s1355 + $0x58] sm:$0xff]
        %v1368 = vld [vmem:[%s1355 + $0x60] sm:$0xff]
        %v1369 = vld [vmem:[%s1355 + $0x68] sm:$0xff]
        %v1370 = vld [vmem:[%s1355 + $0x70] sm:$0xff]
        %v1371 = vld [vmem:[%s1355 + $0x78] sm:$0xff]
        %1372 = vmatpush.msra.mxu0 %v1371
        %1373 = vmatpush.msra.mxu0 %v1370
        %1374 = vmatpush.msra.mxu0 %v1369
        %1375 = vmatpush.msra.mxu0 %v1368
        %1376 = vmatpush.msra.mxu0 %v1367
        %1377 = vmatpush.msra.mxu0 %v1366
        %1378 = vmatpush.msra.mxu0 %v1365
        %1379 = vmatpush.msra.mxu0 %v1364
        %1380 = vmatpush.msra.mxu0 %v1363
        %1381 = vmatpush.msra.mxu0 %v1362
        %1382 = vmatpush.msra.mxu0 %v1361
        %1383 = vmatpush.msra.mxu0 %v1360
        %1384 = vmatpush.msra.mxu0 %v1359
        %1385 = vmatpush.msra.mxu0 %v1358
        %1386 = vmatpush.msra.mxu0 %v1357
        %1387 = vmatpush.msra.mxu0 %v1356
        %1388 = vmatmul.f32.gmra.mxu0 %v224
        %v1389 = vpop.f32.mrf.mxu0
        %v1390 = vadd.f32 %v306, %v1389
        %1391 = vmatmul.f32.gmra.mxu0 %v225
        %v1392 = vpop.f32.mrf.mxu0
        %v1393 = vadd.f32 %v306, %v1392
        %1394 = vmatmul.f32.gmra.mxu0 %v226
        %v1395 = vpop.f32.mrf.mxu0
        %v1396 = vadd.f32 %v306, %v1395
        %1397 = vmatmul.f32.gmra.mxu0 %v227
        %v1398 = vpop.f32.mrf.mxu0
        %v1399 = vadd.f32 %v306, %v1398
        %1400 = vmatmul.f32.gmra.mxu0 %v228
        %v1401 = vpop.f32.mrf.mxu0
        %v1402 = vadd.f32 %v306, %v1401
        %1403 = vmatmul.f32.gmra.mxu0 %v229
        %v1404 = vpop.f32.mrf.mxu0
        %v1405 = vadd.f32 %v306, %v1404
        %1406 = vmatmul.f32.gmra.mxu0 %v230
        %v1407 = vpop.f32.mrf.mxu0
        %v1408 = vadd.f32 %v306, %v1407
        %1409 = vmatmul.f32.gmra.mxu0 %v231
        %v1410 = vpop.f32.mrf.mxu0
        %v1411 = vadd.f32 %v306, %v1410
        %1412 = vmatmul.f32.gmra.mxu0 %v232
        %v1413 = vpop.f32.mrf.mxu0
        %v1414 = vadd.f32 %v306, %v1413
        %1415 = vmatmul.f32.gmra.mxu0 %v233
        %v1416 = vpop.f32.mrf.mxu0
        %v1417 = vadd.f32 %v306, %v1416
        %1418 = vmatmul.f32.gmra.mxu0 %v234
        %v1419 = vpop.f32.mrf.mxu0
        %v1420 = vadd.f32 %v306, %v1419
        %1421 = vmatmul.f32.gmra.mxu0 %v235
        %v1422 = vpop.f32.mrf.mxu0
        %v1423 = vadd.f32 %v306, %v1422
        %1424 = vmatmul.f32.gmra.mxu0 %v236
        %v1425 = vpop.f32.mrf.mxu0
        %v1426 = vadd.f32 %v306, %v1425
        %1427 = vmatmul.f32.gmra.mxu0 %v237
        %v1428 = vpop.f32.mrf.mxu0
        %v1429 = vadd.f32 %v306, %v1428
        %1430 = vmatmul.f32.gmra.mxu0 %v238
        %v1431 = vpop.f32.mrf.mxu0
        %v1432 = vadd.f32 %v306, %v1431
        %1433 = vmatmul.f32.gmra.mxu0 %v239
        %v1434 = vpop.f32.mrf.mxu0
        %v1435 = vadd.f32 %v306, %v1434
        %1436 = vmatmul.f32.gmra.mxu0 %v240
        %v1437 = vpop.f32.mrf.mxu0
        %v1438 = vadd.f32 %v306, %v1437
        %1439 = vmatmul.f32.gmra.mxu0 %v241
        %v1440 = vpop.f32.mrf.mxu0
        %v1441 = vadd.f32 %v306, %v1440
        %1442 = vmatmul.f32.gmra.mxu0 %v242
        %v1443 = vpop.f32.mrf.mxu0
        %v1444 = vadd.f32 %v306, %v1443
        %1445 = vmatmul.f32.gmra.mxu0 %v243
        %v1446 = vpop.f32.mrf.mxu0
        %v1447 = vadd.f32 %v306, %v1446
        %1448 = vmatmul.f32.gmra.mxu0 %v244
        %v1449 = vpop.f32.mrf.mxu0
        %v1450 = vadd.f32 %v306, %v1449
        %1451 = vmatmul.f32.gmra.mxu0 %v245
        %v1452 = vpop.f32.mrf.mxu0
        %v1453 = vadd.f32 %v306, %v1452
        %1454 = vmatmul.f32.gmra.mxu0 %v246
        %v1455 = vpop.f32.mrf.mxu0
        %v1456 = vadd.f32 %v306, %v1455
        %1457 = vmatmul.f32.gmra.mxu0 %v247
        %v1458 = vpop.f32.mrf.mxu0
        %v1459 = vadd.f32 %v306, %v1458
        %1460 = vmatmul.f32.gmra.mxu0 %v248
        %v1461 = vpop.f32.mrf.mxu0
        %v1462 = vadd.f32 %v306, %v1461
        %1463 = vmatmul.f32.gmra.mxu0 %v249
        %v1464 = vpop.f32.mrf.mxu0
        %v1465 = vadd.f32 %v306, %v1464
        %1466 = vmatmul.f32.gmra.mxu0 %v250
        %v1467 = vpop.f32.mrf.mxu0
        %v1468 = vadd.f32 %v306, %v1467
        %1469 = vmatmul.f32.gmra.mxu0 %v251
        %v1470 = vpop.f32.mrf.mxu0
        %v1471 = vadd.f32 %v306, %v1470
        %1472 = vmatmul.f32.gmra.mxu0 %v252
        %v1473 = vpop.f32.mrf.mxu0
        %v1474 = vadd.f32 %v306, %v1473
        %1475 = vmatmul.f32.gmra.mxu0 %v253
        %v1476 = vpop.f32.mrf.mxu0
        %v1477 = vadd.f32 %v306, %v1476
        %1478 = vmatmul.f32.gmra.mxu0 %v254
        %v1479 = vpop.f32.mrf.mxu0
        %v1480 = vadd.f32 %v306, %v1479
        %1481 = vmatmul.f32.gmra.mxu0 %v255
        %v1482 = vpop.f32.mrf.mxu0
        %v1483 = vadd.f32 %v306, %v1482
        %1484 = vmatmul.f32.gmra.mxu0 %v256
        %v1485 = vpop.f32.mrf.mxu0
        %v1486 = vadd.f32 %v306, %v1485
        %1487 = vmatmul.f32.gmra.mxu0 %v257
        %v1488 = vpop.f32.mrf.mxu0
        %v1489 = vadd.f32 %v306, %v1488
        %1490 = vmatmul.f32.gmra.mxu0 %v258
        %v1491 = vpop.f32.mrf.mxu0
        %v1492 = vadd.f32 %v306, %v1491
        %1493 = vmatmul.f32.gmra.mxu0 %v259
        %v1494 = vpop.f32.mrf.mxu0
        %v1495 = vadd.f32 %v306, %v1494
        %1496 = vmatmul.f32.gmra.mxu0 %v260
        %v1497 = vpop.f32.mrf.mxu0
        %v1498 = vadd.f32 %v306, %v1497
        %1499 = vmatmul.f32.gmra.mxu0 %v261
        %v1500 = vpop.f32.mrf.mxu0
        %v1501 = vadd.f32 %v306, %v1500
        %1502 = vmatmul.f32.gmra.mxu0 %v262
        %v1503 = vpop.f32.mrf.mxu0
        %v1504 = vadd.f32 %v306, %v1503
        %1505 = vmatmul.f32.gmra.mxu0 %v263
        %v1506 = vpop.f32.mrf.mxu0
        %v1507 = vadd.f32 %v306, %v1506
        %1508 = vmatmul.f32.gmra.mxu0 %v264
        %v1509 = vpop.f32.mrf.mxu0
        %v1510 = vadd.f32 %v306, %v1509
        %1511 = vmatmul.f32.gmra.mxu0 %v265
        %v1512 = vpop.f32.mrf.mxu0
        %v1513 = vadd.f32 %v306, %v1512
        %1514 = vmatmul.f32.gmra.mxu0 %v266
        %v1515 = vpop.f32.mrf.mxu0
        %v1516 = vadd.f32 %v306, %v1515
        %1517 = vmatmul.f32.gmra.mxu0 %v267
        %v1518 = vpop.f32.mrf.mxu0
        %v1519 = vadd.f32 %v306, %v1518
        %1520 = vmatmul.f32.gmra.mxu0 %v268
        %v1521 = vpop.f32.mrf.mxu0
        %v1522 = vadd.f32 %v306, %v1521
        %1523 = vmatmul.f32.gmra.mxu0 %v269
        %v1524 = vpop.f32.mrf.mxu0
        %v1525 = vadd.f32 %v306, %v1524
        %1526 = vmatmul.f32.gmra.mxu0 %v270
        %v1527 = vpop.f32.mrf.mxu0
        %v1528 = vadd.f32 %v306, %v1527
        %1529 = vmatmul.f32.gmra.mxu0 %v271
        %v1530 = vpop.f32.mrf.mxu0
        %v1531 = vadd.f32 %v306, %v1530
        %1532 = vmatmul.f32.gmra.mxu0 %v272
        %v1533 = vpop.f32.mrf.mxu0
        %v1534 = vadd.f32 %v306, %v1533
        %1535 = vmatmul.f32.gmra.mxu0 %v273
        %v1536 = vpop.f32.mrf.mxu0
        %v1537 = vadd.f32 %v306, %v1536
        %1538 = vmatmul.f32.gmra.mxu0 %v274
        %v1539 = vpop.f32.mrf.mxu0
        %v1540 = vadd.f32 %v306, %v1539
        %1541 = vmatmul.f32.gmra.mxu0 %v275
        %v1542 = vpop.f32.mrf.mxu0
        %v1543 = vadd.f32 %v306, %v1542
        %1544 = vmatmul.f32.gmra.mxu0 %v276
        %v1545 = vpop.f32.mrf.mxu0
        %v1546 = vadd.f32 %v306, %v1545
        %1547 = vmatmul.f32.gmra.mxu0 %v277
        %v1548 = vpop.f32.mrf.mxu0
        %v1549 = vadd.f32 %v306, %v1548
        %1550 = vmatmul.f32.gmra.mxu0 %v278
        %v1551 = vpop.f32.mrf.mxu0
        %v1552 = vadd.f32 %v306, %v1551
        %1553 = vmatmul.f32.gmra.mxu0 %v279
        %v1554 = vpop.f32.mrf.mxu0
        %v1555 = vadd.f32 %v306, %v1554
        %1556 = vmatmul.f32.gmra.mxu0 %v280
        %v1557 = vpop.f32.mrf.mxu0
        %v1558 = vadd.f32 %v306, %v1557
        %1559 = vmatmul.f32.gmra.mxu0 %v281
        %v1560 = vpop.f32.mrf.mxu0
        %v1561 = vadd.f32 %v306, %v1560
        %1562 = vmatmul.f32.gmra.mxu0 %v282
        %v1563 = vpop.f32.mrf.mxu0
        %v1564 = vadd.f32 %v306, %v1563
        %1565 = vmatmul.f32.gmra.mxu0 %v283
        %v1566 = vpop.f32.mrf.mxu0
        %v1567 = vadd.f32 %v306, %v1566
        %1568 = vmatmul.f32.gmra.mxu0 %v284
        %v1569 = vpop.f32.mrf.mxu0
        %v1570 = vadd.f32 %v306, %v1569
        %1571 = vmatmul.f32.gmra.mxu0 %v285
        %v1572 = vpop.f32.mrf.mxu0
        %v1573 = vadd.f32 %v306, %v1572
        %1574 = vmatmul.f32.gmra.mxu0 %v286
        %v1575 = vpop.f32.mrf.mxu0
        %v1576 = vadd.f32 %v306, %v1575
        %1577 = vmatmul.f32.gmra.mxu0 %v287
        %v1578 = vpop.f32.mrf.mxu0
        %v1579 = vadd.f32 %v306, %v1578
        %1580 = vdwg.mxu0
        %v1581 = vmax.f32 %v1390, 0.0
        %v1582 = vmax.f32 %v1393, 0.0
        %v1583 = vmax.f32 %v1396, 0.0
        %v1584 = vmax.f32 %v1399, 0.0
        %v1585 = vmax.f32 %v1402, 0.0
        %v1586 = vmax.f32 %v1405, 0.0
        %v1587 = vmax.f32 %v1408, 0.0
        %v1588 = vmax.f32 %v1411, 0.0
        %v1589 = vmax.f32 %v1414, 0.0
        %v1590 = vmax.f32 %v1417, 0.0
        %v1591 = vmax.f32 %v1420, 0.0
        %v1592 = vmax.f32 %v1423, 0.0
        %v1593 = vmax.f32 %v1426, 0.0
        %v1594 = vmax.f32 %v1429, 0.0
        %v1595 = vmax.f32 %v1432, 0.0
        %v1596 = vmax.f32 %v1435, 0.0
        %v1597 = vmax.f32 %v1438, 0.0
        %v1598 = vmax.f32 %v1441, 0.0
        %v1599 = vmax.f32 %v1444, 0.0
        %v1600 = vmax.f32 %v1447, 0.0
        %v1601 = vmax.f32 %v1450, 0.0
        %v1602 = vmax.f32 %v1453, 0.0
        %v1603 = vmax.f32 %v1456, 0.0
        %v1604 = vmax.f32 %v1459, 0.0
        %v1605 = vmax.f32 %v1462, 0.0
        %v1606 = vmax.f32 %v1465, 0.0
        %v1607 = vmax.f32 %v1468, 0.0
        %v1608 = vmax.f32 %v1471, 0.0
        %v1609 = vmax.f32 %v1474, 0.0
        %v1610 = vmax.f32 %v1477, 0.0
        %v1611 = vmax.f32 %v1480, 0.0
        %v1612 = vmax.f32 %v1483, 0.0
        %v1613 = vmax.f32 %v1486, 0.0
        %v1614 = vmax.f32 %v1489, 0.0
        %v1615 = vmax.f32 %v1492, 0.0
        %v1616 = vmax.f32 %v1495, 0.0
        %v1617 = vmax.f32 %v1498, 0.0
        %v1618 = vmax.f32 %v1501, 0.0
        %v1619 = vmax.f32 %v1504, 0.0
        %v1620 = vmax.f32 %v1507, 0.0
        %v1621 = vmax.f32 %v1510, 0.0
        %v1622 = vmax.f32 %v1513, 0.0
        %v1623 = vmax.f32 %v1516, 0.0
        %v1624 = vmax.f32 %v1519, 0.0
        %v1625 = vmax.f32 %v1522, 0.0
        %v1626 = vmax.f32 %v1525, 0.0
        %v1627 = vmax.f32 %v1528, 0.0
        %v1628 = vmax.f32 %v1531, 0.0
        %v1629 = vmax.f32 %v1534, 0.0
        %v1630 = vmax.f32 %v1537, 0.0
        %v1631 = vmax.f32 %v1540, 0.0
        %v1632 = vmax.f32 %v1543, 0.0
        %v1633 = vmax.f32 %v1546, 0.0
        %v1634 = vmax.f32 %v1549, 0.0
        %v1635 = vmax.f32 %v1552, 0.0
        %v1636 = vmax.f32 %v1555, 0.0
        %v1637 = vmax.f32 %v1558, 0.0
        %v1638 = vmax.f32 %v1561, 0.0
        %v1639 = vmax.f32 %v1564, 0.0
        %v1640 = vmax.f32 %v1567, 0.0
        %v1641 = vmax.f32 %v1570, 0.0
        %v1642 = vmax.f32 %v1573, 0.0
        %v1643 = vmax.f32 %v1576, 0.0
        %v1644 = vmax.f32 %v1579, 0.0
        %s1645 = scalar_lea.vmem %s221, 136 [#allocation8]
        %1646 = vst [vmem:[%s1645] sm:$0xff] %v1581
        %1647 = vst [vmem:[%s1645 + $0x10] sm:$0xff] %v1582
        %1648 = vst [vmem:[%s1645 + $0x20] sm:$0xff] %v1583
        %1649 = vst [vmem:[%s1645 + $0x30] sm:$0xff] %v1584
        %1650 = vst [vmem:[%s1645 + $0x40] sm:$0xff] %v1585
        %1651 = vst [vmem:[%s1645 + $0x50] sm:$0xff] %v1586
        %1652 = vst [vmem:[%s1645 + $0x60] sm:$0xff] %v1587
        %1653 = vst [vmem:[%s1645 + $0x70] sm:$0xff] %v1588
        %1654 = vst [vmem:[%s1645 + $0x100] sm:$0xff] %v1589
        %1655 = vst [vmem:[%s1645 + $0x110] sm:$0xff] %v1590
        %1656 = vst [vmem:[%s1645 + $0x120] sm:$0xff] %v1591
        %1657 = vst [vmem:[%s1645 + $0x130] sm:$0xff] %v1592
        %1658 = vst [vmem:[%s1645 + $0x140] sm:$0xff] %v1593
        %1659 = vst [vmem:[%s1645 + $0x150] sm:$0xff] %v1594
        %1660 = vst [vmem:[%s1645 + $0x160] sm:$0xff] %v1595
        %1661 = vst [vmem:[%s1645 + $0x170] sm:$0xff] %v1596
        %1662 = vst [vmem:[%s1645 + $0x200] sm:$0xff] %v1597
        %1663 = vst [vmem:[%s1645 + $0x210] sm:$0xff] %v1598
        %1664 = vst [vmem:[%s1645 + $0x220] sm:$0xff] %v1599
        %1665 = vst [vmem:[%s1645 + $0x230] sm:$0xff] %v1600
        %1666 = vst [vmem:[%s1645 + $0x240] sm:$0xff] %v1601
        %1667 = vst [vmem:[%s1645 + $0x250] sm:$0xff] %v1602
        %1668 = vst [vmem:[%s1645 + $0x260] sm:$0xff] %v1603
        %1669 = vst [vmem:[%s1645 + $0x270] sm:$0xff] %v1604
        %1670 = vst [vmem:[%s1645 + $0x300] sm:$0xff] %v1605
        %1671 = vst [vmem:[%s1645 + $0x310] sm:$0xff] %v1606
        %1672 = vst [vmem:[%s1645 + $0x320] sm:$0xff] %v1607
        %1673 = vst [vmem:[%s1645 + $0x330] sm:$0xff] %v1608
        %1674 = vst [vmem:[%s1645 + $0x340] sm:$0xff] %v1609
        %1675 = vst [vmem:[%s1645 + $0x350] sm:$0xff] %v1610
        %1676 = vst [vmem:[%s1645 + $0x360] sm:$0xff] %v1611
        %1677 = vst [vmem:[%s1645 + $0x370] sm:$0xff] %v1612
        %1678 = vst [vmem:[%s1645 + $0x400] sm:$0xff] %v1613
        %1679 = vst [vmem:[%s1645 + $0x410] sm:$0xff] %v1614
        %1680 = vst [vmem:[%s1645 + $0x420] sm:$0xff] %v1615
        %1681 = vst [vmem:[%s1645 + $0x430] sm:$0xff] %v1616
        %1682 = vst [vmem:[%s1645 + $0x440] sm:$0xff] %v1617
        %1683 = vst [vmem:[%s1645 + $0x450] sm:$0xff] %v1618
        %1684 = vst [vmem:[%s1645 + $0x460] sm:$0xff] %v1619
        %1685 = vst [vmem:[%s1645 + $0x470] sm:$0xff] %v1620
        %1686 = vst [vmem:[%s1645 + $0x500] sm:$0xff] %v1621
        %1687 = vst [vmem:[%s1645 + $0x510] sm:$0xff] %v1622
        %1688 = vst [vmem:[%s1645 + $0x520] sm:$0xff] %v1623
        %1689 = vst [vmem:[%s1645 + $0x530] sm:$0xff] %v1624
        %1690 = vst [vmem:[%s1645 + $0x540] sm:$0xff] %v1625
        %1691 = vst [vmem:[%s1645 + $0x550] sm:$0xff] %v1626
        %1692 = vst [vmem:[%s1645 + $0x560] sm:$0xff] %v1627
        %1693 = vst [vmem:[%s1645 + $0x570] sm:$0xff] %v1628
        %1694 = vst [vmem:[%s1645 + $0x600] sm:$0xff] %v1629
        %1695 = vst [vmem:[%s1645 + $0x610] sm:$0xff] %v1630
        %1696 = vst [vmem:[%s1645 + $0x620] sm:$0xff] %v1631
        %1697 = vst [vmem:[%s1645 + $0x630] sm:$0xff] %v1632
        %1698 = vst [vmem:[%s1645 + $0x640] sm:$0xff] %v1633
        %1699 = vst [vmem:[%s1645 + $0x650] sm:$0xff] %v1634
        %1700 = vst [vmem:[%s1645 + $0x660] sm:$0xff] %v1635
        %1701 = vst [vmem:[%s1645 + $0x670] sm:$0xff] %v1636
        %1702 = vst [vmem:[%s1645 + $0x700] sm:$0xff] %v1637
        %1703 = vst [vmem:[%s1645 + $0x710] sm:$0xff] %v1638
        %1704 = vst [vmem:[%s1645 + $0x720] sm:$0xff] %v1639
        %1705 = vst [vmem:[%s1645 + $0x730] sm:$0xff] %v1640
        %1706 = vst [vmem:[%s1645 + $0x740] sm:$0xff] %v1641
        %1707 = vst [vmem:[%s1645 + $0x750] sm:$0xff] %v1642
        %1708 = vst [vmem:[%s1645 + $0x760] sm:$0xff] %v1643
        %1709 = vst [vmem:[%s1645 + $0x770] sm:$0xff] %v1644
        %s1710 = sand.u32 %s97, 1
        %s1711 = scalar_lea.sflag [#allocation4], %s1710
        %s1712 = sand.u32 %s97, 1
        %s1713 = smul.addr %s1712, 2048
        %s1714 = scalar_lea.vmem [#allocation8], %s1713
        // Predicated region
        $region45: #{tpu_custom_call.1} parent=31 // pred_check
          %p1715 = pneg %p107
        $region46: #{tpu_custom_call.1} parent=31 // pred_check_branch
          %1717 = sbr.rel (%p1715) target = $region48
        $region47: #{tpu_custom_call.1} parent=31 // pred_region
          %s1718 = smul.u32 8, %s21
          %1720 = vsyncadd %s1711, 0
          %s1721 = smul.addr %s1718, 32
          %s1722 = smul.addr %s1721, 8
          %s1723 = scalar_lea.hbm %s3, %s1722
          %s1724 = sshll.u32 %s1714, 4
          %s1725 = int_to_ptr.vmem [resolvable:$true] %s1724
          %s1726 = sshll.u32 %s1723, 4
          %s1727 = int_to_ptr.hbm [resolvable:$true] %s1726
          %1732 = dma.vmem_to_hbm [thread:$0]  %s1725, 32768, %s1727, %s1711, 128, 128, 8
        $region48: #{tpu_custom_call.1} parent=31 // pred_fallthru
          _
      $region32: #{tpu_custom_call.1} parent=5 // pred_fallthru
        _
      %p1733 = scmp.le.s32.totalorder 2, %s16
      // Predicated region
      $region49: #{tpu_custom_call.1} parent=5 // pred_check
        %p1734 = pneg %p1733
      $region50: #{tpu_custom_call.1} parent=5 // pred_check_branch
        %1736 = sbr.rel (%p1734) target = $region52
      $region51: #{tpu_custom_call.1} parent=5 // pred_region
        %s1737 = ssub.s32 %s16, 2
        // Predicated region
        $region53: #{tpu_custom_call.1} parent=51 // pred_check
          %p1738 = pneg %p113
        $region54: #{tpu_custom_call.1} parent=51 // pred_check_branch
          %1740 = sbr.rel (%p1738) target = $region56
        $region55: #{tpu_custom_call.1} parent=51 // pred_region
          %s1741 = sand.u32 %s98, 1
          %s1742 = scalar_lea.sflag [#allocation4], %s1741
          %s1743 = sand.u32 %s98, 1
          %s1744 = smul.addr %s1743, 2048
          %s1745 = scalar_lea.vmem [#allocation8], %s1744
          %1747 = dma.done %s1742, 32768
        $region56: #{tpu_custom_call.1} parent=51 // pred_fallthru
          _
      $region52: #{tpu_custom_call.1} parent=5 // pred_fallthru
        _
    $region6: #{tpu_custom_call.1} parent=1 // loop_footer
      %s20 = sadd.s32 1, %s16
    $region7: #{tpu_custom_call.1} parent=1 // loop_footer_branch
      %15 = sbr.rel target = $region3
    $region8: #{tpu_custom_call.1} parent=1 // loop_exit
      _
    %1748 = vsyncpa [#allocation3], 1
    %s1749 = scalar_lea.sflag [#allocation3], 1
    %1750 = vsyncpa %s1749, 1
    %1751 = vsyncpa [#allocation6], 1
    %1752 = vsyncpa [#allocation4], 1
    %s1753 = scalar_lea.sflag [#allocation4], 1
    %1754 = vsyncpa %s1753, 1

</llo_original>
